<compile_context>
chip_gen: v5e
topology: v5e:2x2
jax: 0.10.0
libtpu: 0.0.40
codegen_flags: <defaults>
</compile_context>

<pallas_src>
import math

import jax
import jax.numpy as jnp
from jax.experimental import pallas as pl
from jax.experimental.pallas import tpu as pltpu


def _layernorm(x, gamma, beta, eps=1e-5):
    # One-pass statistics: var = E[x^2] - mean^2 (single sweep over the block).
    mean = jnp.mean(x, axis=0, keepdims=True)                 # (1, tile)
    mean_sq = jnp.mean(x * x, axis=0, keepdims=True)          # (1, tile)
    var = mean_sq - mean * mean
    return (x - mean) * jax.lax.rsqrt(var + eps) * gamma + beta


def s4block_kernel(xs_ref, xl_ref, tt_ref, d_ref, gamma_ref, beta_ref,
                   wout_ref, bout_ref, w12_ref, b12_ref,
                   o1_ref, o2_ref, z_scr, acc_ref):
    H = acc_ref.shape[0]
    s = pl.program_id(2)                     # reduction (source-tile) axis, innermost
    n_s = pl.num_programs(2)

    @pl.when(s == 0)
    def _init():
        acc_ref[...] = jnp.zeros_like(acc_ref)

    # ---- LayerNorm over d_model for the source (reduction) tile ----
    z_s = _layernorm(xs_ref[0], gamma_ref[...], beta_ref[...])   # (H, tS) f32
    z_scr[...] = z_s.astype(jnp.bfloat16)                        # bf16 MXU operand

    # ---- Depthwise Toeplitz contraction on the MXU ----
    # Per channel h: (1, tS) @ (tS, tL) -> (1, tL), accumulated in f32.
    # H is compile-time, so this loop fully unrolls.  For large H, chunk the
    # unroll or add an H-tile grid axis; the rest of the kernel is unchanged.
    for h in range(H):
        y_h = jnp.dot(z_scr[h:h + 1, :], tt_ref[h],
                      preferred_element_type=jnp.float32)        # (1, tL)
        acc_ref[h:h + 1, :] = acc_ref[h:h + 1, :] + y_h

    # ---- Finalize: rest of S4Layer + S4Block heads, once per output tile ----
    @pl.when(s == n_s - 1)
    def _finalize():
        x_l = xl_ref[0]                                          # (H, tL) f32
        z_l = _layernorm(x_l, gamma_ref[...], beta_ref[...])
        y = acc_ref[...] + d_ref[...] * z_l                      # D skip connection
        # S4 default activation: GELU.  Approximate (tanh) form runs on the EUP.
        y = jax.nn.gelu(y, approximate=True)
        # S4 output_linear (Conv1d k=1), postact=None
        y = jnp.dot(wout_ref[...], y,
                    preferred_element_type=jnp.float32) + bout_ref[...]
        z_res = y + x_l                                          # S4Layer residual
        # S4Block gating + stacked 1x1-conv heads (one (2H, H) matmul)
        g = jnp.tanh(z_res) * jax.nn.sigmoid(z_res)
        o12 = jnp.dot(w12_ref[...], g,
                      preferred_element_type=jnp.float32) + b12_ref[...]
        o1_ref[0] = o12[:H, :] + x_l                             # out1 + original x
        o2_ref[0] = o12[H:, :]


def s4block_forward(x, params, *, tl=128, ts=128,
                    vmem_limit_bytes=48 * 1024 * 1024):
    """x: (B, H, L) f32.  L must be a multiple of tl/ts (pad upstream if not)."""
    B, H, L = x.shape
    Tt, D, gamma, beta, Wout, bout, W12, b12 = params
    assert L % tl == 0 and L % ts == 0 and H % 8 == 0
    n_l, n_s = L // tl, L // ts

    def const(shape):
        nd = len(shape)
        return pl.BlockSpec(shape, lambda b, j, s, _n=nd: (0,) * _n)

    grid_spec = pltpu.PrefetchScalarGridSpec(
        num_scalar_prefetch=0,
        grid=(B, n_l, n_s),                                      # reduction last
        in_specs=[
            pl.BlockSpec((1, H, ts), lambda b, j, s: (b, 0, s)),  # x, source tile
            pl.BlockSpec((1, H, tl), lambda b, j, s: (b, 0, j)),  # x, output tile
            pl.BlockSpec((H, ts, tl), lambda b, j, s: (0, s, j)), # Toeplitz^T (bf16)
            const((H, 1)),                                        # D skip
            const((H, 1)), const((H, 1)),                         # LN gamma / beta
            const((H, H)), const((H, 1)),                         # S4 output_linear
            const((2 * H, H)), const((2 * H, 1)),                 # stacked heads W/b
        ],
        out_specs=(pl.BlockSpec((1, H, tl), lambda b, j, s: (b, 0, j)),
                   pl.BlockSpec((1, H, tl), lambda b, j, s: (b, 0, j))),
        scratch_shapes=[pltpu.VMEM((H, ts), jnp.bfloat16),        # normalized tile
                        pltpu.VMEM((H, tl), jnp.float32)],        # f32 accumulator
    )
    return pl.pallas_call(
        s4block_kernel,
        out_shape=(jax.ShapeDtypeStruct((B, H, L), jnp.float32),
                   jax.ShapeDtypeStruct((B, H, L), jnp.float32)),
        grid_spec=grid_spec,
        compiler_params=pltpu.CompilerParams(
            dimension_semantics=("parallel", "parallel", "arbitrary"),
            vmem_limit_bytes=vmem_limit_bytes),                   # fits v7x 64 MiB
    )(x, x, Tt, D, gamma, beta, Wout, bout, W12, b12)


def make_params(key, H, L, d_state=128):
    """Deterministic synthetic parameters (shapes follow the module __init__)."""
    keys = jax.random.split(key, 8)
    N = d_state // 2   # conjugate-pair diagonal modes

    # TODO(synk): the SSKernel materialization uses complex math and the
    # reference applies it with an FFT long-conv; there is no clean Pallas
    # equivalent, so the depthwise kernel is built on the host (glue) and
    # applied inside the Pallas kernel as a (transposed, bf16) Toeplitz
    # operator — mathematically identical to the FFT path.
    log_dt = math.log(1e-3) + jax.random.uniform(keys[0], (H,)) * (
        math.log(1e-1) - math.log(1e-3))
    dt = jnp.exp(log_dt)
    A = -0.5 + 1j * jnp.pi * jnp.arange(N)                          # (N,)
    C = (jax.random.normal(keys[1], (2, H, N))
         + 1j * jax.random.normal(keys[2], (2, H, N))) * (0.5 ** 0.5)
    dtA = dt[:, None] * A[None, :]                                   # (H, N)
    Ct = C * ((jnp.exp(dtA) - 1.0) / A)[None]                        # (2, H, N)
    K = jnp.einsum('chn,hnl->chl',
                   Ct, jnp.exp(dtA[:, :, None] * jnp.arange(L)))
    K = 2.0 * K.real                                                 # (2, H, L)
    k_fwd, k_bwd = K[0], K[1]

    # Bidirectional FFT conv == Toeplitz operator.  Stored TRANSPOSED
    # (Tt[h, s, l] = T[h, l, s]) so the kernel can feed (tS, tL) tiles straight
    # into the MXU, and in bf16 so streaming T costs half the HBM bandwidth.
    idx = jnp.arange(L)
    diff = idx[:, None] - idx[None, :]                               # [l, s] = l - s
    T_fwd = k_fwd[:, jnp.clip(diff, 0, L - 1)]                       # (H, L, L)
    T_bwd = k_bwd[:, jnp.clip(-diff - 1, 0, L - 1)]
    T = jnp.where((diff >= 0)[None], T_fwd, T_bwd)                   # [h, l, s]
    Tt = jnp.transpose(T, (0, 2, 1)).astype(jnp.bfloat16)            # [h, s, l]

    D = jax.random.normal(keys[3], (H, 1)).astype(jnp.float32)       # S4 skip
    gamma = jnp.ones((H, 1), jnp.float32)                            # LayerNorm affine
    beta = jnp.zeros((H, 1), jnp.float32)

    def lin(k):
        bound = 1.0 / math.sqrt(H)
        kw, kb = jax.random.split(k)
        W = jax.random.uniform(kw, (H, H), minval=-bound, maxval=bound)
        b = jax.random.uniform(kb, (H, 1), minval=-bound, maxval=bound)
        return W.astype(jnp.float32), b.astype(jnp.float32)

    Wout, bout = lin(keys[4])     # S4 output_linear (Conv1d H->H, k=1)
    W1, b1 = lin(keys[5])         # out_linear1
    W2, b2 = lin(keys[6])         # out_linear2
    W12 = jnp.concatenate([W1, W2], axis=0)        # (2H, H) stacked head weights
    b12 = jnp.concatenate([b1, b2], axis=0)        # (2H, 1)
    # time_linear and feature_encoder (num_features=0) are never used in
    # forward(x, features=None), so no parameters are needed for them.
    return (Tt, D, gamma, beta, Wout, bout, W12, b12)


if __name__ == "__main__":
    # L multiple of 128 (lane-dense outputs), H multiple of 8 (sublane tile).
    B, H, L = 2, 8, 256
    key = jax.random.PRNGKey(0)
    kx, kp = jax.random.split(key)
    x = jax.random.normal(kx, (B, H, L), jnp.float32)
    params = make_params(kp, H, L, d_state=128)

    out1, out2 = s4block_forward(x, params, tl=128, ts=128)
    jax.block_until_ready((out1, out2))
    assert out1.shape == (B, H, L) and out2.shape == (B, H, L)
    assert out1.dtype == jnp.float32 and out2.dtype == jnp.float32
    print("KERNEL_OK")
</pallas_src>

<mosaic_0001>
module attributes {stable_mosaic.version = 11 : i64} {
  func.func @s4block_kernel(%arg0: i32, %arg1: i32, %arg2: i32, %arg3: memref<1x8x128xf32, #tpu.memory_space<vmem>>, %arg4: memref<1x8x128xf32, #tpu.memory_space<vmem>>, %arg5: memref<8x128x128xbf16, #tpu.memory_space<vmem>>, %arg6: memref<8x1xf32, #tpu.memory_space<vmem>>, %arg7: memref<8x1xf32, #tpu.memory_space<vmem>>, %arg8: memref<8x1xf32, #tpu.memory_space<vmem>>, %arg9: memref<8x8xf32, #tpu.memory_space<vmem>>, %arg10: memref<8x1xf32, #tpu.memory_space<vmem>>, %arg11: memref<16x8xf32, #tpu.memory_space<vmem>>, %arg12: memref<16x1xf32, #tpu.memory_space<vmem>>, %arg13: memref<1x8x128xf32, #tpu.memory_space<vmem>>, %arg14: memref<1x8x128xf32, #tpu.memory_space<vmem>>, %arg15: memref<8x128xbf16, #tpu.memory_space<vmem>>, %arg16: memref<8x128xf32, #tpu.memory_space<vmem>>) attributes {dimension_semantics = [#tpu.dimension_semantics<parallel>, #tpu.dimension_semantics<parallel>, #tpu.dimension_semantics<arbitrary>], iteration_bounds = array<i64: 2, 2, 2>, scalar_prefetch = 0 : i64, scratch_operands = 2 : i64, tpu.core_type = #tpu.core_type<tc>, window_params = [{transform_indices = @transform_0, window_bounds = array<i64: 1, 8, 128>}, {transform_indices = @transform_1, window_bounds = array<i64: 1, 8, 128>}, {transform_indices = @transform_2, window_bounds = array<i64: 8, 128, 128>}, {pipeline_mode = #tpu.pipeline_mode<synchronous>, transform_indices = @transform_3, window_bounds = array<i64: 8, 1>}, {pipeline_mode = #tpu.pipeline_mode<synchronous>, transform_indices = @transform_4, window_bounds = array<i64: 8, 1>}, {pipeline_mode = #tpu.pipeline_mode<synchronous>, transform_indices = @transform_5, window_bounds = array<i64: 8, 1>}, {pipeline_mode = #tpu.pipeline_mode<synchronous>, transform_indices = @transform_6, window_bounds = array<i64: 8, 8>}, {pipeline_mode = #tpu.pipeline_mode<synchronous>, transform_indices = @transform_7, window_bounds = array<i64: 8, 1>}, {pipeline_mode = #tpu.pipeline_mode<synchronous>, transform_indices = @transform_8, window_bounds = array<i64: 16, 8>}, {pipeline_mode = #tpu.pipeline_mode<synchronous>, transform_indices = @transform_9, window_bounds = array<i64: 16, 1>}, {transform_indices = @transform_10, window_bounds = array<i64: 1, 8, 128>}, {transform_indices = @transform_11, window_bounds = array<i64: 1, 8, 128>}]} {
    %c0_i32 = arith.constant 0 : i32
    %0 = arith.cmpi eq, %arg2, %c0_i32 : i32
    %1 = arith.extui %0 : i1 to i32
    %c0_i32_0 = arith.constant 0 : i32
    %2 = arith.cmpi ne, %1, %c0_i32_0 : i32
    scf.if %2 {
      %cst_87 = arith.constant 0.000000e+00 : f32
      %90 = vector.broadcast %cst_87 : f32 to vector<8x128xf32>
      %c0_88 = arith.constant 0 : index
      %c0_89 = arith.constant 0 : index
      %91 = vector.load %arg16[%c0_88, %c0_89] : memref<8x128xf32, #tpu.memory_space<vmem>>, vector<8x128xf32>
      tpu.vector_store %arg16[%c0_88, %c0_89], %90 {strides = array<i32>} : memref<8x128xf32, #tpu.memory_space<vmem>>, vector<8x128xf32>,
    } else {
    }
    %c0 = arith.constant 0 : index
    %c0_1 = arith.constant 0 : index
    %c0_2 = arith.constant 0 : index
    %3 = vector.load %arg3[%c0, %c0_1, %c0_2] : memref<1x8x128xf32, #tpu.memory_space<vmem>>, vector<1x8x128xf32>
    %4 = vector.shape_cast %3 : vector<1x8x128xf32> to vector<8x128xf32>
    %c0_3 = arith.constant 0 : index
    %c0_4 = arith.constant 0 : index
    %5 = vector.load %arg7[%c0_3, %c0_4] : memref<8x1xf32, #tpu.memory_space<vmem>>, vector<8x1xf32>
    %c0_5 = arith.constant 0 : index
    %c0_6 = arith.constant 0 : index
    %6 = vector.load %arg8[%c0_5, %c0_6] : memref<8x1xf32, #tpu.memory_space<vmem>>, vector<8x1xf32>
    %cst = arith.constant dense<0.000000e+00> : vector<128xf32>
    %7 = vector.multi_reduction <add>, %4, %cst [0] : vector<8x128xf32> to vector<128xf32>
    %8 = vector.shape_cast %7 : vector<128xf32> to vector<1x128xf32>
    %cst_7 = arith.constant 8.000000e+00 : f32
    %9 = vector.broadcast %cst_7 : f32 to vector<1x128xf32>
    %10 = arith.divf %8, %9 : vector<1x128xf32>
    %11 = arith.mulf %4, %4 : vector<8x128xf32>
    %cst_8 = arith.constant dense<0.000000e+00> : vector<128xf32>
    %12 = vector.multi_reduction <add>, %11, %cst_8 [0] : vector<8x128xf32> to vector<128xf32>
    %13 = vector.shape_cast %12 : vector<128xf32> to vector<1x128xf32>
    %cst_9 = arith.constant 8.000000e+00 : f32
    %14 = vector.broadcast %cst_9 : f32 to vector<1x128xf32>
    %15 = arith.divf %13, %14 : vector<1x128xf32>
    %16 = arith.mulf %10, %10 : vector<1x128xf32>
    %17 = arith.subf %15, %16 : vector<1x128xf32>
    %18 = vector.broadcast %10 : vector<1x128xf32> to vector<8x128xf32>
    %19 = arith.subf %4, %18 : vector<8x128xf32>
    %cst_10 = arith.constant 9.99999974E-6 : f32
    %20 = vector.broadcast %cst_10 : f32 to vector<1x128xf32>
    %21 = arith.addf %17, %20 : vector<1x128xf32>
    %22 = math.rsqrt %21 : vector<1x128xf32>
    %23 = vector.broadcast %22 : vector<1x128xf32> to vector<8x128xf32>
    %24 = arith.mulf %19, %23 : vector<8x128xf32>
    %25 = vector.broadcast %5 : vector<8x1xf32> to vector<8x128xf32>
    %26 = arith.mulf %24, %25 : vector<8x128xf32>
    %27 = vector.broadcast %6 : vector<8x1xf32> to vector<8x128xf32>
    %28 = arith.addf %26, %27 : vector<8x128xf32>
    %29 = arith.truncf %28 : vector<8x128xf32> to vector<8x128xbf16>
    %c0_11 = arith.constant 0 : index
    %c0_12 = arith.constant 0 : index
    %30 = vector.load %arg15[%c0_11, %c0_12] : memref<8x128xbf16, #tpu.memory_space<vmem>>, vector<8x128xbf16>
    tpu.vector_store %arg15[%c0_11, %c0_12], %29 {strides = array<i32>} : memref<8x128xbf16, #tpu.memory_space<vmem>>, vector<8x128xbf16>,
    %c0_13 = arith.constant 0 : index
    %c0_14 = arith.constant 0 : index
    %31 = vector.load %arg15[%c0_13, %c0_14] : memref<8x128xbf16, #tpu.memory_space<vmem>>, vector<1x128xbf16>
    %c0_15 = arith.constant 0 : index
    %c0_16 = arith.constant 0 : index
    %c0_17 = arith.constant 0 : index
    %32 = vector.load %arg5[%c0_15, %c0_16, %c0_17] : memref<8x128x128xbf16, #tpu.memory_space<vmem>>, vector<1x128x128xbf16>
    %33 = vector.shape_cast %32 : vector<1x128x128xbf16> to vector<128x128xbf16>
    %cst_18 = arith.constant dense<0.000000e+00> : vector<1x128xf32>
    %34 = tpu.matmul %31, %33, %cst_18 {dimension_numbers = #tpu.dot_dimension_numbers<[1], [0], [0], [1], [0, 0, 1, 1], [], []>} : vector<1x128xbf16>, vector<128x128xbf16>, vector<1x128xf32> -> vector<1x128xf32>
    %c0_19 = arith.constant 0 : index
    %c0_20 = arith.constant 0 : index
    %35 = vector.load %arg16[%c0_19, %c0_20] : memref<8x128xf32, #tpu.memory_space<vmem>>, vector<1x128xf32>
    %36 = arith.addf %35, %34 : vector<1x128xf32>
    %c0_21 = arith.constant 0 : index
    %c0_22 = arith.constant 0 : index
    %37 = vector.load %arg16[%c0_21, %c0_22] : memref<8x128xf32, #tpu.memory_space<vmem>>, vector<1x128xf32>
    tpu.vector_store %arg16[%c0_21, %c0_22], %36 {strides = array<i32>} : memref<8x128xf32, #tpu.memory_space<vmem>>, vector<1x128xf32>,
    %c1 = arith.constant 1 : index
    %c0_23 = arith.constant 0 : index
    %38 = vector.load %arg15[%c1, %c0_23] : memref<8x128xbf16, #tpu.memory_space<vmem>>, vector<1x128xbf16>
    %c1_24 = arith.constant 1 : index
    %c0_25 = arith.constant 0 : index
    %c0_26 = arith.constant 0 : index
    %39 = vector.load %arg5[%c1_24, %c0_25, %c0_26] : memref<8x128x128xbf16, #tpu.memory_space<vmem>>, vector<1x128x128xbf16>
    %40 = vector.shape_cast %39 : vector<1x128x128xbf16> to vector<128x128xbf16>
    %cst_27 = arith.constant dense<0.000000e+00> : vector<1x128xf32>
    %41 = tpu.matmul %38, %40, %cst_27 {dimension_numbers = #tpu.dot_dimension_numbers<[1], [0], [0], [1], [0, 0, 1, 1], [], []>} : vector<1x128xbf16>, vector<128x128xbf16>, vector<1x128xf32> -> vector<1x128xf32>
    %c1_28 = arith.constant 1 : index
    %c0_29 = arith.constant 0 : index
    %42 = vector.load %arg16[%c1_28, %c0_29] : memref<8x128xf32, #tpu.memory_space<vmem>>, vector<1x128xf32>
    %43 = arith.addf %42, %41 : vector<1x128xf32>
    %c1_30 = arith.constant 1 : index
    %c0_31 = arith.constant 0 : index
    %44 = vector.load %arg16[%c1_30, %c0_31] : memref<8x128xf32, #tpu.memory_space<vmem>>, vector<1x128xf32>
    tpu.vector_store %arg16[%c1_30, %c0_31], %43 {strides = array<i32>} : memref<8x128xf32, #tpu.memory_space<vmem>>, vector<1x128xf32>,
    %c2 = arith.constant 2 : index
    %c0_32 = arith.constant 0 : index
    %45 = vector.load %arg15[%c2, %c0_32] : memref<8x128xbf16, #tpu.memory_space<vmem>>, vector<1x128xbf16>
    %c2_33 = arith.constant 2 : index
    %c0_34 = arith.constant 0 : index
    %c0_35 = arith.constant 0 : index
    %46 = vector.load %arg5[%c2_33, %c0_34, %c0_35] : memref<8x128x128xbf16, #tpu.memory_space<vmem>>, vector<1x128x128xbf16>
    %47 = vector.shape_cast %46 : vector<1x128x128xbf16> to vector<128x128xbf16>
    %cst_36 = arith.constant dense<0.000000e+00> : vector<1x128xf32>
    %48 = tpu.matmul %45, %47, %cst_36 {dimension_numbers = #tpu.dot_dimension_numbers<[1], [0], [0], [1], [0, 0, 1, 1], [], []>} : vector<1x128xbf16>, vector<128x128xbf16>, vector<1x128xf32> -> vector<1x128xf32>
    %c2_37 = arith.constant 2 : index
    %c0_38 = arith.constant 0 : index
    %49 = vector.load %arg16[%c2_37, %c0_38] : memref<8x128xf32, #tpu.memory_space<vmem>>, vector<1x128xf32>
    %50 = arith.addf %49, %48 : vector<1x128xf32>
    %c2_39 = arith.constant 2 : index
    %c0_40 = arith.constant 0 : index
    %51 = vector.load %arg16[%c2_39, %c0_40] : memref<8x128xf32, #tpu.memory_space<vmem>>, vector<1x128xf32>
    tpu.vector_store %arg16[%c2_39, %c0_40], %50 {strides = array<i32>} : memref<8x128xf32, #tpu.memory_space<vmem>>, vector<1x128xf32>,
    %c3 = arith.constant 3 : index
    %c0_41 = arith.constant 0 : index
    %52 = vector.load %arg15[%c3, %c0_41] : memref<8x128xbf16, #tpu.memory_space<vmem>>, vector<1x128xbf16>
    %c3_42 = arith.constant 3 : index
    %c0_43 = arith.constant 0 : index
    %c0_44 = arith.constant 0 : index
    %53 = vector.load %arg5[%c3_42, %c0_43, %c0_44] : memref<8x128x128xbf16, #tpu.memory_space<vmem>>, vector<1x128x128xbf16>
    %54 = vector.shape_cast %53 : vector<1x128x128xbf16> to vector<128x128xbf16>
    %cst_45 = arith.constant dense<0.000000e+00> : vector<1x128xf32>
    %55 = tpu.matmul %52, %54, %cst_45 {dimension_numbers = #tpu.dot_dimension_numbers<[1], [0], [0], [1], [0, 0, 1, 1], [], []>} : vector<1x128xbf16>, vector<128x128xbf16>, vector<1x128xf32> -> vector<1x128xf32>
    %c3_46 = arith.constant 3 : index
    %c0_47 = arith.constant 0 : index
    %56 = vector.load %arg16[%c3_46, %c0_47] : memref<8x128xf32, #tpu.memory_space<vmem>>, vector<1x128xf32>
    %57 = arith.addf %56, %55 : vector<1x128xf32>
    %c3_48 = arith.constant 3 : index
    %c0_49 = arith.constant 0 : index
    %58 = vector.load %arg16[%c3_48, %c0_49] : memref<8x128xf32, #tpu.memory_space<vmem>>, vector<1x128xf32>
    tpu.vector_store %arg16[%c3_48, %c0_49], %57 {strides = array<i32>} : memref<8x128xf32, #tpu.memory_space<vmem>>, vector<1x128xf32>,
    %c4 = arith.constant 4 : index
    %c0_50 = arith.constant 0 : index
    %59 = vector.load %arg15[%c4, %c0_50] : memref<8x128xbf16, #tpu.memory_space<vmem>>, vector<1x128xbf16>
    %c4_51 = arith.constant 4 : index
    %c0_52 = arith.constant 0 : index
    %c0_53 = arith.constant 0 : index
    %60 = vector.load %arg5[%c4_51, %c0_52, %c0_53] : memref<8x128x128xbf16, #tpu.memory_space<vmem>>, vector<1x128x128xbf16>
    %61 = vector.shape_cast %60 : vector<1x128x128xbf16> to vector<128x128xbf16>
    %cst_54 = arith.constant dense<0.000000e+00> : vector<1x128xf32>
    %62 = tpu.matmul %59, %61, %cst_54 {dimension_numbers = #tpu.dot_dimension_numbers<[1], [0], [0], [1], [0, 0, 1, 1], [], []>} : vector<1x128xbf16>, vector<128x128xbf16>, vector<1x128xf32> -> vector<1x128xf32>
    %c4_55 = arith.constant 4 : index
    %c0_56 = arith.constant 0 : index
    %63 = vector.load %arg16[%c4_55, %c0_56] : memref<8x128xf32, #tpu.memory_space<vmem>>, vector<1x128xf32>
    %64 = arith.addf %63, %62 : vector<1x128xf32>
    %c4_57 = arith.constant 4 : index
    %c0_58 = arith.constant 0 : index
    %65 = vector.load %arg16[%c4_57, %c0_58] : memref<8x128xf32, #tpu.memory_space<vmem>>, vector<1x128xf32>
    tpu.vector_store %arg16[%c4_57, %c0_58], %64 {strides = array<i32>} : memref<8x128xf32, #tpu.memory_space<vmem>>, vector<1x128xf32>,
    %c5 = arith.constant 5 : index
    %c0_59 = arith.constant 0 : index
    %66 = vector.load %arg15[%c5, %c0_59] : memref<8x128xbf16, #tpu.memory_space<vmem>>, vector<1x128xbf16>
    %c5_60 = arith.constant 5 : index
    %c0_61 = arith.constant 0 : index
    %c0_62 = arith.constant 0 : index
    %67 = vector.load %arg5[%c5_60, %c0_61, %c0_62] : memref<8x128x128xbf16, #tpu.memory_space<vmem>>, vector<1x128x128xbf16>
    %68 = vector.shape_cast %67 : vector<1x128x128xbf16> to vector<128x128xbf16>
    %cst_63 = arith.constant dense<0.000000e+00> : vector<1x128xf32>
    %69 = tpu.matmul %66, %68, %cst_63 {dimension_numbers = #tpu.dot_dimension_numbers<[1], [0], [0], [1], [0, 0, 1, 1], [], []>} : vector<1x128xbf16>, vector<128x128xbf16>, vector<1x128xf32> -> vector<1x128xf32>
    %c5_64 = arith.constant 5 : index
    %c0_65 = arith.constant 0 : index
    %70 = vector.load %arg16[%c5_64, %c0_65] : memref<8x128xf32, #tpu.memory_space<vmem>>, vector<1x128xf32>
    %71 = arith.addf %70, %69 : vector<1x128xf32>
    %c5_66 = arith.constant 5 : index
    %c0_67 = arith.constant 0 : index
    %72 = vector.load %arg16[%c5_66, %c0_67] : memref<8x128xf32, #tpu.memory_space<vmem>>, vector<1x128xf32>
    tpu.vector_store %arg16[%c5_66, %c0_67], %71 {strides = array<i32>} : memref<8x128xf32, #tpu.memory_space<vmem>>, vector<1x128xf32>,
    %c6 = arith.constant 6 : index
    %c0_68 = arith.constant 0 : index
    %73 = vector.load %arg15[%c6, %c0_68] : memref<8x128xbf16, #tpu.memory_space<vmem>>, vector<1x128xbf16>
    %c6_69 = arith.constant 6 : index
    %c0_70 = arith.constant 0 : index
    %c0_71 = arith.constant 0 : index
    %74 = vector.load %arg5[%c6_69, %c0_70, %c0_71] : memref<8x128x128xbf16, #tpu.memory_space<vmem>>, vector<1x128x128xbf16>
    %75 = vector.shape_cast %74 : vector<1x128x128xbf16> to vector<128x128xbf16>
    %cst_72 = arith.constant dense<0.000000e+00> : vector<1x128xf32>
    %76 = tpu.matmul %73, %75, %cst_72 {dimension_numbers = #tpu.dot_dimension_numbers<[1], [0], [0], [1], [0, 0, 1, 1], [], []>} : vector<1x128xbf16>, vector<128x128xbf16>, vector<1x128xf32> -> vector<1x128xf32>
    %c6_73 = arith.constant 6 : index
    %c0_74 = arith.constant 0 : index
    %77 = vector.load %arg16[%c6_73, %c0_74] : memref<8x128xf32, #tpu.memory_space<vmem>>, vector<1x128xf32>
    %78 = arith.addf %77, %76 : vector<1x128xf32>
    %c6_75 = arith.constant 6 : index
    %c0_76 = arith.constant 0 : index
    %79 = vector.load %arg16[%c6_75, %c0_76] : memref<8x128xf32, #tpu.memory_space<vmem>>, vector<1x128xf32>
    tpu.vector_store %arg16[%c6_75, %c0_76], %78 {strides = array<i32>} : memref<8x128xf32, #tpu.memory_space<vmem>>, vector<1x128xf32>,
    %c7 = arith.constant 7 : index
    %c0_77 = arith.constant 0 : index
    %80 = vector.load %arg15[%c7, %c0_77] : memref<8x128xbf16, #tpu.memory_space<vmem>>, vector<1x128xbf16>
    %c7_78 = arith.constant 7 : index
    %c0_79 = arith.constant 0 : index
    %c0_80 = arith.constant 0 : index
    %81 = vector.load %arg5[%c7_78, %c0_79, %c0_80] : memref<8x128x128xbf16, #tpu.memory_space<vmem>>, vector<1x128x128xbf16>
    %82 = vector.shape_cast %81 : vector<1x128x128xbf16> to vector<128x128xbf16>
    %cst_81 = arith.constant dense<0.000000e+00> : vector<1x128xf32>
    %83 = tpu.matmul %80, %82, %cst_81 {dimension_numbers = #tpu.dot_dimension_numbers<[1], [0], [0], [1], [0, 0, 1, 1], [], []>} : vector<1x128xbf16>, vector<128x128xbf16>, vector<1x128xf32> -> vector<1x128xf32>
    %c7_82 = arith.constant 7 : index
    %c0_83 = arith.constant 0 : index
    %84 = vector.load %arg16[%c7_82, %c0_83] : memref<8x128xf32, #tpu.memory_space<vmem>>, vector<1x128xf32>
    %85 = arith.addf %84, %83 : vector<1x128xf32>
    %c7_84 = arith.constant 7 : index
    %c0_85 = arith.constant 0 : index
    %86 = vector.load %arg16[%c7_84, %c0_85] : memref<8x128xf32, #tpu.memory_space<vmem>>, vector<1x128xf32>
    tpu.vector_store %arg16[%c7_84, %c0_85], %85 {strides = array<i32>} : memref<8x128xf32, #tpu.memory_space<vmem>>, vector<1x128xf32>,
    %c1_i32 = arith.constant 1 : i32
    %87 = arith.cmpi eq, %arg2, %c1_i32 : i32
    %88 = arith.extui %87 : i1 to i32
    %c0_i32_86 = arith.constant 0 : i32
    %89 = arith.cmpi ne, %88, %c0_i32_86 : i32
    scf.if %89 {
      %c0_87 = arith.constant 0 : index
      %c0_88 = arith.constant 0 : index
      %c0_89 = arith.constant 0 : index
      %90 = vector.load %arg4[%c0_87, %c0_88, %c0_89] : memref<1x8x128xf32, #tpu.memory_space<vmem>>, vector<1x8x128xf32>
      %91 = vector.shape_cast %90 : vector<1x8x128xf32> to vector<8x128xf32>
      %c0_90 = arith.constant 0 : index
      %c0_91 = arith.constant 0 : index
      %92 = vector.load %arg7[%c0_90, %c0_91] : memref<8x1xf32, #tpu.memory_space<vmem>>, vector<8x1xf32>
      %c0_92 = arith.constant 0 : index
      %c0_93 = arith.constant 0 : index
      %93 = vector.load %arg8[%c0_92, %c0_93] : memref<8x1xf32, #tpu.memory_space<vmem>>, vector<8x1xf32>
      %cst_94 = arith.constant dense<0.000000e+00> : vector<128xf32>
      %94 = vector.multi_reduction <add>, %91, %cst_94 [0] : vector<8x128xf32> to vector<128xf32>
      %95 = vector.shape_cast %94 : vector<128xf32> to vector<1x128xf32>
      %cst_95 = arith.constant 8.000000e+00 : f32
      %96 = vector.broadcast %cst_95 : f32 to vector<1x128xf32>
      %97 = arith.divf %95, %96 : vector<1x128xf32>
      %98 = arith.mulf %91, %91 : vector<8x128xf32>
      %cst_96 = arith.constant dense<0.000000e+00> : vector<128xf32>
      %99 = vector.multi_reduction <add>, %98, %cst_96 [0] : vector<8x128xf32> to vector<128xf32>
      %100 = vector.shape_cast %99 : vector<128xf32> to vector<1x128xf32>
      %cst_97 = arith.constant 8.000000e+00 : f32
      %101 = vector.broadcast %cst_97 : f32 to vector<1x128xf32>
      %102 = arith.divf %100, %101 : vector<1x128xf32>
      %103 = arith.mulf %97, %97 : vector<1x128xf32>
      %104 = arith.subf %102, %103 : vector<1x128xf32>
      %105 = vector.broadcast %97 : vector<1x128xf32> to vector<8x128xf32>
      %106 = arith.subf %91, %105 : vector<8x128xf32>
      %cst_98 = arith.constant 9.99999974E-6 : f32
      %107 = vector.broadcast %cst_98 : f32 to vector<1x128xf32>
      %108 = arith.addf %104, %107 : vector<1x128xf32>
      %109 = math.rsqrt %108 : vector<1x128xf32>
      %110 = vector.broadcast %109 : vector<1x128xf32> to vector<8x128xf32>
      %111 = arith.mulf %106, %110 : vector<8x128xf32>
      %112 = vector.broadcast %92 : vector<8x1xf32> to vector<8x128xf32>
      %113 = arith.mulf %111, %112 : vector<8x128xf32>
      %114 = vector.broadcast %93 : vector<8x1xf32> to vector<8x128xf32>
      %115 = arith.addf %113, %114 : vector<8x128xf32>
      %c0_99 = arith.constant 0 : index
      %c0_100 = arith.constant 0 : index
      %116 = vector.load %arg16[%c0_99, %c0_100] : memref<8x128xf32, #tpu.memory_space<vmem>>, vector<8x128xf32>
      %c0_101 = arith.constant 0 : index
      %c0_102 = arith.constant 0 : index
      %117 = vector.load %arg6[%c0_101, %c0_102] : memref<8x1xf32, #tpu.memory_space<vmem>>, vector<8x1xf32>
      %118 = vector.broadcast %117 : vector<8x1xf32> to vector<8x128xf32>
      %119 = arith.mulf %118, %115 : vector<8x128xf32>
      %120 = arith.addf %116, %119 : vector<8x128xf32>
      %121 = arith.mulf %120, %120 : vector<8x128xf32>
      %122 = arith.mulf %120, %121 : vector<8x128xf32>
      %cst_103 = arith.constant 4.471500e-02 : f32
      %123 = vector.broadcast %cst_103 : f32 to vector<8x128xf32>
      %124 = arith.mulf %123, %122 : vector<8x128xf32>
      %125 = arith.addf %120, %124 : vector<8x128xf32>
      %cst_104 = arith.constant 0.797884583 : f32
      %126 = vector.broadcast %cst_104 : f32 to vector<8x128xf32>
      %127 = arith.mulf %126, %125 : vector<8x128xf32>
      %128 = math.tanh %127 : vector<8x128xf32>
      %cst_105 = arith.constant 1.000000e+00 : f32
      %129 = vector.broadcast %cst_105 : f32 to vector<8x128xf32>
      %130 = arith.addf %129, %128 : vector<8x128xf32>
      %cst_106 = arith.constant 5.000000e-01 : f32
      %131 = vector.broadcast %cst_106 : f32 to vector<8x128xf32>
      %132 = arith.mulf %131, %130 : vector<8x128xf32>
      %133 = arith.mulf %120, %132 : vector<8x128xf32>
      %c0_107 = arith.constant 0 : index
      %c0_108 = arith.constant 0 : index
      %134 = vector.load %arg9[%c0_107, %c0_108] : memref<8x8xf32, #tpu.memory_space<vmem>>, vector<8x8xf32>
      %cst_109 = arith.constant dense<0.000000e+00> : vector<8x128xf32>
      %135 = tpu.matmul %134, %133, %cst_109 {dimension_numbers = #tpu.dot_dimension_numbers<[1], [0], [0], [1], [0, 0, 1, 1], [], []>} : vector<8x8xf32>, vector<8x128xf32>, vector<8x128xf32> -> vector<8x128xf32>
      %c0_110 = arith.constant 0 : index
      %c0_111 = arith.constant 0 : index
      %136 = vector.load %arg10[%c0_110, %c0_111] : memref<8x1xf32, #tpu.memory_space<vmem>>, vector<8x1xf32>
      %137 = vector.broadcast %136 : vector<8x1xf32> to vector<8x128xf32>
      %138 = arith.addf %135, %137 : vector<8x128xf32>
      %139 = arith.addf %138, %91 : vector<8x128xf32>
      %140 = math.tanh %139 : vector<8x128xf32>
      %141 = arith.negf %139 : vector<8x128xf32>
      %142 = math.exp %141 : vector<8x128xf32>
      %cst_112 = arith.constant 1.000000e+00 : f32
      %143 = vector.broadcast %cst_112 : f32 to vector<8x128xf32>
      %144 = arith.addf %143, %142 : vector<8x128xf32>
      %145 = arith.divf %143, %144 : vector<8x128xf32>
      %146 = arith.mulf %140, %145 : vector<8x128xf32>
      %c0_113 = arith.constant 0 : index
      %c0_114 = arith.constant 0 : index
      %147 = vector.load %arg11[%c0_113, %c0_114] : memref<16x8xf32, #tpu.memory_space<vmem>>, vector<16x8xf32>
      %cst_115 = arith.constant dense<0.000000e+00> : vector<16x128xf32>
      %148 = tpu.matmul %147, %146, %cst_115 {dimension_numbers = #tpu.dot_dimension_numbers<[1], [0], [0], [1], [0, 0, 1, 1], [], []>} : vector<16x8xf32>, vector<8x128xf32>, vector<16x128xf32> -> vector<16x128xf32>
      %c0_116 = arith.constant 0 : index
      %c0_117 = arith.constant 0 : index
      %149 = vector.load %arg12[%c0_116, %c0_117] : memref<16x1xf32, #tpu.memory_space<vmem>>, vector<16x1xf32>
      %150 = vector.broadcast %149 : vector<16x1xf32> to vector<16x128xf32>
      %151 = arith.addf %148, %150 : vector<16x128xf32>
      %152 = vector.extract_strided_slice %151 {offsets = [0, 0], sizes = [8, 128], strides = [1, 1]} : vector<16x128xf32> to vector<8x128xf32>
      %153 = arith.addf %152, %91 : vector<8x128xf32>
      %c0_118 = arith.constant 0 : index
      %c0_119 = arith.constant 0 : index
      %c0_120 = arith.constant 0 : index
      %154 = vector.load %arg13[%c0_118, %c0_119, %c0_120] : memref<1x8x128xf32, #tpu.memory_space<vmem>>, vector<1x8x128xf32>
      %155 = vector.shape_cast %154 : vector<1x8x128xf32> to vector<8x128xf32>
      %156 = vector.shape_cast %153 : vector<8x128xf32> to vector<1x8x128xf32>
      tpu.vector_store %arg13[%c0_118, %c0_119, %c0_120], %156 {strides = array<i32>} : memref<1x8x128xf32, #tpu.memory_space<vmem>>, vector<1x8x128xf32>,
      %157 = vector.extract_strided_slice %151 {offsets = [8, 0], sizes = [8, 128], strides = [1, 1]} : vector<16x128xf32> to vector<8x128xf32>
      %c0_121 = arith.constant 0 : index
      %c0_122 = arith.constant 0 : index
      %c0_123 = arith.constant 0 : index
      %158 = vector.load %arg14[%c0_121, %c0_122, %c0_123] : memref<1x8x128xf32, #tpu.memory_space<vmem>>, vector<1x8x128xf32>
      %159 = vector.shape_cast %158 : vector<1x8x128xf32> to vector<8x128xf32>
      %160 = vector.shape_cast %157 : vector<8x128xf32> to vector<1x8x128xf32>
      tpu.vector_store %arg14[%c0_121, %c0_122, %c0_123], %160 {strides = array<i32>} : memref<1x8x128xf32, #tpu.memory_space<vmem>>, vector<1x8x128xf32>,
    } else {
    }
    return
  }
  func.func @transform_0(%arg0: i32, %arg1: i32, %arg2: i32) -> (i32, i32, i32) {
    %c0_i32 = arith.constant 0 : i32
    %c0_i32_0 = arith.constant 0 : i32
    return %arg0, %c0_i32, %arg2 : i32, i32, i32
  }
  func.func @transform_1(%arg0: i32, %arg1: i32, %arg2: i32) -> (i32, i32, i32) {
    %c0_i32 = arith.constant 0 : i32
    %c0_i32_0 = arith.constant 0 : i32
    return %arg0, %c0_i32, %arg1 : i32, i32, i32
  }
  func.func @transform_2(%arg0: i32, %arg1: i32, %arg2: i32) -> (i32, i32, i32) {
    %c0_i32 = arith.constant 0 : i32
    %c0_i32_0 = arith.constant 0 : i32
    return %c0_i32, %arg2, %arg1 : i32, i32, i32
  }
  func.func @transform_3(%arg0: i32, %arg1: i32, %arg2: i32) -> (i32, i32) {
    %c0_i32 = arith.constant 0 : i32
    %c0_i32_0 = arith.constant 0 : i32
    %c0_i32_1 = arith.constant 0 : i32
    return %c0_i32, %c0_i32_0 : i32, i32
  }
  func.func @transform_4(%arg0: i32, %arg1: i32, %arg2: i32) -> (i32, i32) {
    %c0_i32 = arith.constant 0 : i32
    %c0_i32_0 = arith.constant 0 : i32
    %c0_i32_1 = arith.constant 0 : i32
    return %c0_i32, %c0_i32_0 : i32, i32
  }
  func.func @transform_5(%arg0: i32, %arg1: i32, %arg2: i32) -> (i32, i32) {
    %c0_i32 = arith.constant 0 : i32
    %c0_i32_0 = arith.constant 0 : i32
    %c0_i32_1 = arith.constant 0 : i32
    return %c0_i32, %c0_i32_0 : i32, i32
  }
  func.func @transform_6(%arg0: i32, %arg1: i32, %arg2: i32) -> (i32, i32) {
    %c0_i32 = arith.constant 0 : i32
    %c0_i32_0 = arith.constant 0 : i32
    %c0_i32_1 = arith.constant 0 : i32
    return %c0_i32, %c0_i32_0 : i32, i32
  }
  func.func @transform_7(%arg0: i32, %arg1: i32, %arg2: i32) -> (i32, i32) {
    %c0_i32 = arith.constant 0 : i32
    %c0_i32_0 = arith.constant 0 : i32
    %c0_i32_1 = arith.constant 0 : i32
    return %c0_i32, %c0_i32_0 : i32, i32
  }
  func.func @transform_8(%arg0: i32, %arg1: i32, %arg2: i32) -> (i32, i32) {
    %c0_i32 = arith.constant 0 : i32
    %c0_i32_0 = arith.constant 0 : i32
    %c0_i32_1 = arith.constant 0 : i32
    return %c0_i32, %c0_i32_0 : i32, i32
  }
  func.func @transform_9(%arg0: i32, %arg1: i32, %arg2: i32) -> (i32, i32) {
    %c0_i32 = arith.constant 0 : i32
    %c0_i32_0 = arith.constant 0 : i32
    %c0_i32_1 = arith.constant 0 : i32
    return %c0_i32, %c0_i32_0 : i32, i32
  }
  func.func @transform_10(%arg0: i32, %arg1: i32, %arg2: i32) -> (i32, i32, i32) {
    %c0_i32 = arith.constant 0 : i32
    %c0_i32_0 = arith.constant 0 : i32
    return %arg0, %c0_i32, %arg1 : i32, i32, i32
  }
  func.func @transform_11(%arg0: i32, %arg1: i32, %arg2: i32) -> (i32, i32, i32) {
    %c0_i32 = arith.constant 0 : i32
    %c0_i32_0 = arith.constant 0 : i32
    return %arg0, %c0_i32, %arg1 : i32, i32, i32
  }
}

</mosaic_0001>

<llo_original>
// kernel: tpu_custom_call.1
$region0: #{tpu_custom_call.1}
  #allocation0 [shape = 'u32[]', space=smem, size = 0x4, offset = 0x4, fixed_abs, tag = 'smem constant byte address 0x4 - core index']
  #allocation1 [shape = 'u32[72,128]{1,0:T(1,128)}', space=vmem, size = 0x9000, scoped, tag = 'internal scratch']
  #allocation2 [shape = 'bf16[8,128]{1,0:T(8,128)(2,1)}', space=vmem, size = 0x800, scoped, tag = 'scratch operand']
  #allocation3 [shape = 'f32[8,128]{1,0:T(8,128)}', space=vmem, size = 0x1000, scoped, tag = 'scratch operand']
  #allocation12 [shape = 's32[]', space=sflag, size = 0x4, offset = 0, fixed_abs, tag = 'sflag constant byte address 0x0 - dummy sync flag']
  %s0 = inlined_call_operand.vmem [shape: f32[2,8,256], index: 0, kind: input, shape index: {}]
  %s1 = inlined_call_operand.hbm [shape: f32[2,8,256], index: 1, kind: input, shape index: {}]
  %s2 = inlined_call_operand.hbm [shape: bf16[8,256,256], index: 2, kind: input, shape index: {}]
  %s3 = inlined_call_operand.vmem [shape: f32[8,1], index: 3, kind: input, shape index: {}]
  %s4 = inlined_call_operand.vmem [shape: f32[8,1], index: 4, kind: input, shape index: {}]
  %s5 = inlined_call_operand.vmem [shape: f32[8,1], index: 5, kind: input, shape index: {}]
  %s6 = inlined_call_operand.vmem [shape: f32[8,8], index: 6, kind: input, shape index: {}]
  %s7 = inlined_call_operand.vmem [shape: f32[8,1], index: 7, kind: input, shape index: {}]
  %s8 = inlined_call_operand.vmem [shape: f32[16,8], index: 8, kind: input, shape index: {}]
  %s9 = inlined_call_operand.vmem [shape: f32[16,1], index: 9, kind: input, shape index: {}]
  %s10 = inlined_call_operand.hbm [shape: f32[2,8,256], index: 10, kind: output, shape index: {0}]
  %s11 = inlined_call_operand.hbm [shape: f32[2,8,256], index: 11, kind: output, shape index: {1}]
  %12 = xla_tuple %s10, %s11
  %s13 = sld [smem:[#allocation0]]
  $region97: #{tpu_custom_call.1} parent=0
    _
  %s15 = ssub.s32 1, %s13
  %s16 = scalar_select 0, %s15, %s13
  $region1: #{tpu_custom_call.1} parent=0
    #allocation4 [shape = 'u8[8192]{0}', space=vmem, size = 0x2000, scoped, tag = 'input window, operand 1']
    #allocation5 [shape = 's32[2]{0}', space=sflag, size = 0x8, scoped, tag = 'scoped memory for tpu_custom_call.1']
    #allocation6 [shape = 's32[2]{0}', space=sflag, size = 0x8, scoped, tag = 'scoped memory for tpu_custom_call.1']
    #allocation7 [shape = 'u8[524288]{0}', space=vmem, size = 0x80000, scoped, tag = 'input window, operand 2']
    #allocation8 [shape = 's32[2]{0}', space=sflag, size = 0x8, scoped, tag = 'scoped memory for tpu_custom_call.1']
    #allocation9 [shape = 'u8[8192]{0}', space=vmem, size = 0x2000, scoped, tag = 'output window, operand 0']
    #allocation10 [shape = 'u8[8192]{0}', space=vmem, size = 0x2000, scoped, tag = 'output window, operand 1']
    #allocation11 [shape = 's32[2]{0}', space=sflag, size = 0x8, scoped, tag = 'scoped memory for tpu_custom_call.1']
    %17 = vsyncpa [#allocation5], 0
    %s18 = scalar_lea.sflag [#allocation5], 1
    %19 = vsyncpa %s18, 0
    %20 = vsyncpa [#allocation8], 0
    %s21 = scalar_lea.sflag [#allocation8], 1
    %22 = vsyncpa %s21, 0
    %23 = vsyncpa [#allocation6], 0
    %s24 = scalar_lea.sflag [#allocation6], 1
    %25 = vsyncpa %s24, 0
    %26 = vsyncpa [#allocation11], 0
    %s27 = scalar_lea.sflag [#allocation11], 1
    %28 = vsyncpa %s27, 0
    loop: start=0, step=1, limit=10
    $region2: #{tpu_custom_call.1} parent=1 // loop_pre_header
      _
    $region3: #{tpu_custom_call.1} parent=1 // loop_header
      %s30 = sphi 0, %s34
      %p31 = scmp.ge.s32.totalorder %s30, 10
      %s37 = sphi 0, %s56
      %s38 = sphi 0, %s52
      %s39 = sphi 0, %s48
      %s40 = sphi 0, %s37
      %s41 = sphi 0, %s38
      %s42 = sphi 0, %s39
      %s43 = sphi 0, %s40
      %s44 = sphi 0, %s41
      %s45 = sphi 0, %s42
      %s61 = sphi 0, %s63
      %s64 = sphi 0, %s61
      %s65 = sphi 0, %s64
      %s81 = sphi 0, %s65
      %s89 = sphi 0, %s91
      %s92 = sphi 0, %s89
      %s93 = sphi 0, %s92
      %s109 = sphi 0, %s93
      %s117 = sphi 0, %s119
      %s120 = sphi 0, %s117
      %s121 = sphi 0, %s120
      %s137 = sphi 0, %s121
      %s141 = sphi 0, %s141
      %s143 = sphi 0, %s141
      %s144 = sphi 0, %s143
      %s158 = sphi 0, %s144
      %s162 = sphi 0, %s162
      %s164 = sphi 0, %s162
      %s165 = sphi 0, %s164
      %s179 = sphi 0, %s165
      %s183 = sphi 0, %s183
      %s185 = sphi 0, %s183
      %s186 = sphi 0, %s185
      %s200 = sphi 0, %s186
      %s204 = sphi 0, %s204
      %s206 = sphi 0, %s204
      %s207 = sphi 0, %s206
      %s221 = sphi 0, %s207
      %s225 = sphi 0, %s225
      %s227 = sphi 0, %s225
      %s228 = sphi 0, %s227
      %s242 = sphi 0, %s228
      %s246 = sphi 0, %s246
      %s248 = sphi 0, %s246
      %s249 = sphi 0, %s248
      %s263 = sphi 0, %s249
      %s267 = sphi 0, %s267
      %s269 = sphi 0, %s267
      %s270 = sphi 0, %s269
      %s284 = sphi 0, %s270
      %s292 = sphi 0, %s294
      %s295 = sphi 0, %s292
      %s296 = sphi 0, %s295
      %s312 = sphi 0, %s296
      %s320 = sphi 0, %s322
      %s323 = sphi 0, %s320
      %s324 = sphi 0, %s323
      %s340 = sphi 0, %s324
    $region4: #{tpu_custom_call.1} parent=1 // loop_header_branch
      %33 = sbr.rel (%p31) target = $region8
    $region5: #{tpu_custom_call.1} parent=1 // loop_body
      %s35 = ssub.s32 %s30, 1
      %s36 = ssub.s32 %s30, 2
      %s46 = sadd.s32 1, %s39
      %p47 = scmp.ge.s32.totalorder %s46, 2
      %s48 = scalar_select %p47, 0, %s46
      %s49 = sadd.s32 1, %s38
      %s50 = scalar_select %p47, %s49, %s38
      %p51 = scmp.ge.s32.totalorder %s50, 2
      %s52 = scalar_select %p51, 0, %s50
      %s53 = sadd.s32 1, %s37
      %s54 = scalar_select %p51, %s53, %s37
      %p55 = scmp.ge.s32.totalorder %s54, 2
      %s56 = scalar_select %p55, 0, %s54
      %s57 = ssub.s32 %s37, %s56
      %s58 = ssub.s32 %s39, %s48
      %s59 = sor.u32 %s57, %s58
      %p60 = scmp.eq.s32.totalorder %s59, 0
      %s62 = sadd.s32 %s61, 1
      %s63 = scalar_select %p60, %s61, %s62
      %p66 = pneg %p60
      %p67 = scmp.eq.s32.totalorder %s30, 7
      %p68 = por %p66, %p67
      %p69 = scmp.ne.s32.totalorder %s61, %s64
      %p70 = scmp.eq.s32.totalorder %s30, 0
      %p71 = por %p69, %p70
      %p72 = scmp.ne.s32.totalorder %s61, %s64
      %p73 = scmp.eq.s32.totalorder %s35, 7
      %p74 = por %p72, %p73
      %p75 = scmp.ne.s32.totalorder %s64, %s65
      %p76 = scmp.eq.s32.totalorder %s35, 0
      %p77 = por %p75, %p76
      %p78 = scmp.ne.s32.totalorder %s64, %s65
      %p79 = scmp.eq.s32.totalorder %s36, 7
      %p80 = por %p78, %p79
      %p82 = scmp.ne.s32.totalorder %s65, %s81
      %p83 = scmp.eq.s32.totalorder %s36, 0
      %p84 = por %p82, %p83
      %s85 = ssub.s32 %s37, %s56
      %s86 = ssub.s32 %s38, %s52
      %s87 = sor.u32 %s85, %s86
      %p88 = scmp.eq.s32.totalorder %s87, 0
      %s90 = sadd.s32 %s89, 1
      %s91 = scalar_select %p88, %s89, %s90
      %p94 = pneg %p88
      %p95 = scmp.eq.s32.totalorder %s30, 7
      %p96 = por %p94, %p95
      %p97 = scmp.ne.s32.totalorder %s89, %s92
      %p98 = scmp.eq.s32.totalorder %s30, 0
      %p99 = por %p97, %p98
      %p100 = scmp.ne.s32.totalorder %s89, %s92
      %p101 = scmp.eq.s32.totalorder %s35, 7
      %p102 = por %p100, %p101
      %p103 = scmp.ne.s32.totalorder %s92, %s93
      %p104 = scmp.eq.s32.totalorder %s35, 0
      %p105 = por %p103, %p104
      %p106 = scmp.ne.s32.totalorder %s92, %s93
      %p107 = scmp.eq.s32.totalorder %s36, 7
      %p108 = por %p106, %p107
      %p110 = scmp.ne.s32.totalorder %s93, %s109
      %p111 = scmp.eq.s32.totalorder %s36, 0
      %p112 = por %p110, %p111
      %s113 = ssub.s32 %s39, %s48
      %s114 = ssub.s32 %s38, %s52
      %s115 = sor.u32 %s113, %s114
      %p116 = scmp.eq.s32.totalorder %s115, 0
      %s118 = sadd.s32 %s117, 1
      %s119 = scalar_select %p116, %s117, %s118
      %p122 = pneg %p116
      %p123 = scmp.eq.s32.totalorder %s30, 7
      %p124 = por %p122, %p123
      %p125 = scmp.ne.s32.totalorder %s117, %s120
      %p126 = scmp.eq.s32.totalorder %s30, 0
      %p127 = por %p125, %p126
      %p128 = scmp.ne.s32.totalorder %s117, %s120
      %p129 = scmp.eq.s32.totalorder %s35, 7
      %p130 = por %p128, %p129
      %p131 = scmp.ne.s32.totalorder %s120, %s121
      %p132 = scmp.eq.s32.totalorder %s35, 0
      %p133 = por %p131, %p132
      %p134 = scmp.ne.s32.totalorder %s120, %s121
      %p135 = scmp.eq.s32.totalorder %s36, 7
      %p136 = por %p134, %p135
      %p138 = scmp.ne.s32.totalorder %s121, %s137
      %p139 = scmp.eq.s32.totalorder %s36, 0
      %p140 = por %p138, %p139
      %s142 = sadd.s32 %s141, 1
      %p145 = scmp.eq.s32.totalorder %s30, 7
      %p146 = scmp.ne.s32.totalorder %s141, %s143
      %p147 = scmp.eq.s32.totalorder %s30, 0
      %p148 = por %p146, %p147
      %p149 = scmp.ne.s32.totalorder %s141, %s143
      %p150 = scmp.eq.s32.totalorder %s35, 7
      %p151 = por %p149, %p150
      %p152 = scmp.ne.s32.totalorder %s143, %s144
      %p153 = scmp.eq.s32.totalorder %s35, 0
      %p154 = por %p152, %p153
      %p155 = scmp.ne.s32.totalorder %s143, %s144
      %p156 = scmp.eq.s32.totalorder %s36, 7
      %p157 = por %p155, %p156
      %p159 = scmp.ne.s32.totalorder %s144, %s158
      %p160 = scmp.eq.s32.totalorder %s36, 0
      %p161 = por %p159, %p160
      %s163 = sadd.s32 %s162, 1
      %p166 = scmp.eq.s32.totalorder %s30, 7
      %p167 = scmp.ne.s32.totalorder %s162, %s164
      %p168 = scmp.eq.s32.totalorder %s30, 0
      %p169 = por %p167, %p168
      %p170 = scmp.ne.s32.totalorder %s162, %s164
      %p171 = scmp.eq.s32.totalorder %s35, 7
      %p172 = por %p170, %p171
      %p173 = scmp.ne.s32.totalorder %s164, %s165
      %p174 = scmp.eq.s32.totalorder %s35, 0
      %p175 = por %p173, %p174
      %p176 = scmp.ne.s32.totalorder %s164, %s165
      %p177 = scmp.eq.s32.totalorder %s36, 7
      %p178 = por %p176, %p177
      %p180 = scmp.ne.s32.totalorder %s165, %s179
      %p181 = scmp.eq.s32.totalorder %s36, 0
      %p182 = por %p180, %p181
      %s184 = sadd.s32 %s183, 1
      %p187 = scmp.eq.s32.totalorder %s30, 7
      %p188 = scmp.ne.s32.totalorder %s183, %s185
      %p189 = scmp.eq.s32.totalorder %s30, 0
      %p190 = por %p188, %p189
      %p191 = scmp.ne.s32.totalorder %s183, %s185
      %p192 = scmp.eq.s32.totalorder %s35, 7
      %p193 = por %p191, %p192
      %p194 = scmp.ne.s32.totalorder %s185, %s186
      %p195 = scmp.eq.s32.totalorder %s35, 0
      %p196 = por %p194, %p195
      %p197 = scmp.ne.s32.totalorder %s185, %s186
      %p198 = scmp.eq.s32.totalorder %s36, 7
      %p199 = por %p197, %p198
      %p201 = scmp.ne.s32.totalorder %s186, %s200
      %p202 = scmp.eq.s32.totalorder %s36, 0
      %p203 = por %p201, %p202
      %s205 = sadd.s32 %s204, 1
      %p208 = scmp.eq.s32.totalorder %s30, 7
      %p209 = scmp.ne.s32.totalorder %s204, %s206
      %p210 = scmp.eq.s32.totalorder %s30, 0
      %p211 = por %p209, %p210
      %p212 = scmp.ne.s32.totalorder %s204, %s206
      %p213 = scmp.eq.s32.totalorder %s35, 7
      %p214 = por %p212, %p213
      %p215 = scmp.ne.s32.totalorder %s206, %s207
      %p216 = scmp.eq.s32.totalorder %s35, 0
      %p217 = por %p215, %p216
      %p218 = scmp.ne.s32.totalorder %s206, %s207
      %p219 = scmp.eq.s32.totalorder %s36, 7
      %p220 = por %p218, %p219
      %p222 = scmp.ne.s32.totalorder %s207, %s221
      %p223 = scmp.eq.s32.totalorder %s36, 0
      %p224 = por %p222, %p223
      %s226 = sadd.s32 %s225, 1
      %p229 = scmp.eq.s32.totalorder %s30, 7
      %p230 = scmp.ne.s32.totalorder %s225, %s227
      %p231 = scmp.eq.s32.totalorder %s30, 0
      %p232 = por %p230, %p231
      %p233 = scmp.ne.s32.totalorder %s225, %s227
      %p234 = scmp.eq.s32.totalorder %s35, 7
      %p235 = por %p233, %p234
      %p236 = scmp.ne.s32.totalorder %s227, %s228
      %p237 = scmp.eq.s32.totalorder %s35, 0
      %p238 = por %p236, %p237
      %p239 = scmp.ne.s32.totalorder %s227, %s228
      %p240 = scmp.eq.s32.totalorder %s36, 7
      %p241 = por %p239, %p240
      %p243 = scmp.ne.s32.totalorder %s228, %s242
      %p244 = scmp.eq.s32.totalorder %s36, 0
      %p245 = por %p243, %p244
      %s247 = sadd.s32 %s246, 1
      %p250 = scmp.eq.s32.totalorder %s30, 7
      %p251 = scmp.ne.s32.totalorder %s246, %s248
      %p252 = scmp.eq.s32.totalorder %s30, 0
      %p253 = por %p251, %p252
      %p254 = scmp.ne.s32.totalorder %s246, %s248
      %p255 = scmp.eq.s32.totalorder %s35, 7
      %p256 = por %p254, %p255
      %p257 = scmp.ne.s32.totalorder %s248, %s249
      %p258 = scmp.eq.s32.totalorder %s35, 0
      %p259 = por %p257, %p258
      %p260 = scmp.ne.s32.totalorder %s248, %s249
      %p261 = scmp.eq.s32.totalorder %s36, 7
      %p262 = por %p260, %p261
      %p264 = scmp.ne.s32.totalorder %s249, %s263
      %p265 = scmp.eq.s32.totalorder %s36, 0
      %p266 = por %p264, %p265
      %s268 = sadd.s32 %s267, 1
      %p271 = scmp.eq.s32.totalorder %s30, 7
      %p272 = scmp.ne.s32.totalorder %s267, %s269
      %p273 = scmp.eq.s32.totalorder %s30, 0
      %p274 = por %p272, %p273
      %p275 = scmp.ne.s32.totalorder %s267, %s269
      %p276 = scmp.eq.s32.totalorder %s35, 7
      %p277 = por %p275, %p276
      %p278 = scmp.ne.s32.totalorder %s269, %s270
      %p279 = scmp.eq.s32.totalorder %s35, 0
      %p280 = por %p278, %p279
      %p281 = scmp.ne.s32.totalorder %s269, %s270
      %p282 = scmp.eq.s32.totalorder %s36, 7
      %p283 = por %p281, %p282
      %p285 = scmp.ne.s32.totalorder %s270, %s284
      %p286 = scmp.eq.s32.totalorder %s36, 0
      %p287 = por %p285, %p286
      %s288 = ssub.s32 %s37, %s56
      %s289 = ssub.s32 %s38, %s52
      %s290 = sor.u32 %s288, %s289
      %p291 = scmp.eq.s32.totalorder %s290, 0
      %s293 = sadd.s32 %s292, 1
      %s294 = scalar_select %p291, %s292, %s293
      %p297 = pneg %p291
      %p298 = scmp.eq.s32.totalorder %s30, 7
      %p299 = por %p297, %p298
      %p300 = scmp.ne.s32.totalorder %s292, %s295
      %p301 = scmp.eq.s32.totalorder %s30, 0
      %p302 = por %p300, %p301
      %p303 = scmp.ne.s32.totalorder %s292, %s295
      %p304 = scmp.eq.s32.totalorder %s35, 7
      %p305 = por %p303, %p304
      %p306 = scmp.ne.s32.totalorder %s295, %s296
      %p307 = scmp.eq.s32.totalorder %s35, 0
      %p308 = por %p306, %p307
      %p309 = scmp.ne.s32.totalorder %s295, %s296
      %p310 = scmp.eq.s32.totalorder %s36, 7
      %p311 = por %p309, %p310
      %p313 = scmp.ne.s32.totalorder %s296, %s312
      %p314 = scmp.eq.s32.totalorder %s36, 0
      %p315 = por %p313, %p314
      %s316 = ssub.s32 %s37, %s56
      %s317 = ssub.s32 %s38, %s52
      %s318 = sor.u32 %s316, %s317
      %p319 = scmp.eq.s32.totalorder %s318, 0
      %s321 = sadd.s32 %s320, 1
      %s322 = scalar_select %p319, %s320, %s321
      %p325 = pneg %p319
      %p326 = scmp.eq.s32.totalorder %s30, 7
      %p327 = por %p325, %p326
      %p328 = scmp.ne.s32.totalorder %s320, %s323
      %p329 = scmp.eq.s32.totalorder %s30, 0
      %p330 = por %p328, %p329
      %p331 = scmp.ne.s32.totalorder %s320, %s323
      %p332 = scmp.eq.s32.totalorder %s35, 7
      %p333 = por %p331, %p332
      %p334 = scmp.ne.s32.totalorder %s323, %s324
      %p335 = scmp.eq.s32.totalorder %s35, 0
      %p336 = por %p334, %p335
      %p337 = scmp.ne.s32.totalorder %s323, %s324
      %p338 = scmp.eq.s32.totalorder %s36, 7
      %p339 = por %p337, %p338
      %p341 = scmp.ne.s32.totalorder %s324, %s340
      %p342 = scmp.eq.s32.totalorder %s36, 0
      %p343 = por %p341, %p342
      %p344 = scmp.le.s32.totalorder 1, %s30
      %p345 = scmp.lt.s32.totalorder %s30, 9
      %p346 = pnand %p344, %p345
      %p347 = pneg %p346
      // Predicated region
      $region9: #{tpu_custom_call.1} parent=5 // pred_check
        _
      $region10: #{tpu_custom_call.1} parent=5 // pred_check_branch
        %349 = sbr.rel (%p346) target = $region12
      $region11: #{tpu_custom_call.1} parent=5 // pred_region
        %s350 = ssub.s32 %s30, 1
        // Predicated region
        $region13: #{tpu_custom_call.1} parent=11 // pred_check
          %p351 = pneg %p154
        $region14: #{tpu_custom_call.1} parent=11 // pred_check_branch
          %353 = sbr.rel (%p351) target = $region16
        $region15: #{tpu_custom_call.1} parent=11 // pred_region
          _
        $region16: #{tpu_custom_call.1} parent=11 // pred_fallthru
          _
        // Predicated region
        $region17: #{tpu_custom_call.1} parent=11 // pred_check
          %p354 = pneg %p175
        $region18: #{tpu_custom_call.1} parent=11 // pred_check_branch
          %356 = sbr.rel (%p354) target = $region20
        $region19: #{tpu_custom_call.1} parent=11 // pred_region
          _
        $region20: #{tpu_custom_call.1} parent=11 // pred_fallthru
          _
        // Predicated region
        $region21: #{tpu_custom_call.1} parent=11 // pred_check
          %p357 = pneg %p196
        $region22: #{tpu_custom_call.1} parent=11 // pred_check_branch
          %359 = sbr.rel (%p357) target = $region24
        $region23: #{tpu_custom_call.1} parent=11 // pred_region
          _
        $region24: #{tpu_custom_call.1} parent=11 // pred_fallthru
          _
        // Predicated region
        $region25: #{tpu_custom_call.1} parent=11 // pred_check
          %p360 = pneg %p217
        $region26: #{tpu_custom_call.1} parent=11 // pred_check_branch
          %362 = sbr.rel (%p360) target = $region28
        $region27: #{tpu_custom_call.1} parent=11 // pred_region
          _
        $region28: #{tpu_custom_call.1} parent=11 // pred_fallthru
          _
        // Predicated region
        $region29: #{tpu_custom_call.1} parent=11 // pred_check
          %p363 = pneg %p238
        $region30: #{tpu_custom_call.1} parent=11 // pred_check_branch
          %365 = sbr.rel (%p363) target = $region32
        $region31: #{tpu_custom_call.1} parent=11 // pred_region
          _
        $region32: #{tpu_custom_call.1} parent=11 // pred_fallthru
          _
        // Predicated region
        $region33: #{tpu_custom_call.1} parent=11 // pred_check
          %p366 = pneg %p259
        $region34: #{tpu_custom_call.1} parent=11 // pred_check_branch
          %368 = sbr.rel (%p366) target = $region36
        $region35: #{tpu_custom_call.1} parent=11 // pred_region
          _
        $region36: #{tpu_custom_call.1} parent=11 // pred_fallthru
          _
        // Predicated region
        $region37: #{tpu_custom_call.1} parent=11 // pred_check
          %p369 = pneg %p280
        $region38: #{tpu_custom_call.1} parent=11 // pred_check_branch
          %371 = sbr.rel (%p369) target = $region40
        $region39: #{tpu_custom_call.1} parent=11 // pred_region
          _
        $region40: #{tpu_custom_call.1} parent=11 // pred_fallthru
          _
      $region12: #{tpu_custom_call.1} parent=5 // pred_fallthru
        _
      %p372 = scmp.lt.s32.totalorder %s30, 8
      // Predicated region
      $region41: #{tpu_custom_call.1} parent=5 // pred_check
        %p373 = pneg %p372
      $region42: #{tpu_custom_call.1} parent=5 // pred_check_branch
        %375 = sbr.rel (%p373) target = $region44
      $region43: #{tpu_custom_call.1} parent=5 // pred_region
        // Predicated region
        $region45: #{tpu_custom_call.1} parent=43 // pred_check
          %p376 = pneg %p71
        $region46: #{tpu_custom_call.1} parent=43 // pred_check_branch
          %378 = sbr.rel (%p376) target = $region48
        $region47: #{tpu_custom_call.1} parent=43 // pred_region
          %p379 = scmp.lt.s32.totalorder %s37, 1
          %s380 = scalar_select %p379, %s37, 1
          %p381 = scmp.lt.s32.totalorder %s39, 1
          %s382 = scalar_select %p381, %s39, 1
          %s383 = smul.addr %s380, 2
          %s384 = sadd.s32 %s382, %s383
          %s385 = smul.addr %s384, 8
          %s386 = scalar_lea.vmem %s0, %s385
        $region48: #{tpu_custom_call.1} parent=43 // pred_fallthru
          _
        // Predicated region
        $region49: #{tpu_custom_call.1} parent=43 // pred_check
          %p387 = pneg %p99
        $region50: #{tpu_custom_call.1} parent=43 // pred_check_branch
          %389 = sbr.rel (%p387) target = $region52
        $region51: #{tpu_custom_call.1} parent=43 // pred_region
          %s390 = sand.u32 %s89, 1
          %s391 = scalar_lea.sflag [#allocation5], %s390
          %s392 = sand.u32 %s89, 1
          %s393 = smul.addr %s392, 8
          %s394 = scalar_lea.vmem [#allocation4], %s393
          %396 = vsyncadd %s391, 0
          %s397 = smul.addr %s37, 2
          %s398 = sadd.s32 %s38, %s397
          %s399 = smul.addr %s398, 8
          %s400 = scalar_lea.hbm %s1, %s399
          %s402 = sshll.u32 %s400, 4
          %s403 = int_to_ptr.hbm [resolvable:$true] %s402
          %s404 = sshll.u32 %s394, 4
          %s405 = int_to_ptr.vmem [resolvable:$true] %s404
          %407 = dma.hbm_to_vmem [thread:$0]  %s403, 128, %s405, %s391
        $region52: #{tpu_custom_call.1} parent=43 // pred_fallthru
          _
        // Predicated region
        $region53: #{tpu_custom_call.1} parent=43 // pred_check
          %p408 = pneg %p127
        $region54: #{tpu_custom_call.1} parent=43 // pred_check_branch
          %410 = sbr.rel (%p408) target = $region56
        $region55: #{tpu_custom_call.1} parent=43 // pred_region
          #allocation13 [shape = 'u32[6]{0}', space=smem, size = 0x18, scoped, tag = 'DMA stride descriptor']
          %s411 = sand.u32 %s117, 1
          %s412 = scalar_lea.sflag [#allocation8], %s411
          %s413 = sand.u32 %s117, 1
          %s414 = smul.addr %s413, 512
          %s415 = scalar_lea.vmem [#allocation7], %s414
          %s416 = smul.u32 16, %s39
          %418 = vsyncadd %s412, 0
          %s419 = smul.addr %s416, 2
          %s420 = sadd.s32 %s38, %s419
          %s421 = smul.addr %s420, 4
          %s422 = scalar_lea.hbm %s2, %s421
          %s424 = sshll.u32 1, 14
          %s425 = sxor.u32 4294967295, %s424
          %s427 = sld [smem:[#allocation0]]
          %s428 = sadd.s32 2, %s427
          %s430 = sshll.u32 7, 26
          %s431 = sxor.u32 4294967295, %s430
          %s432 = sand.u32 0, %s431
          %s433 = sshll.u32 %s428, 26
          %s434 = sor.u32 %s432, %s433
          %s435 = sshll.u32 %s422, 4
          %s436 = int_to_ptr.hbm [resolvable:$true] %s435
          %s437 = sshll.u32 %s415, 4
          %s438 = int_to_ptr.vmem [resolvable:$true] %s437
          %444 = sst [smem:[#allocation13]] 4096
          %s445 = scalar_lea.smem [#allocation13], 1
          %446 = sst [smem:[%s445]] 1024
          %s447 = scalar_lea.smem [#allocation13], 2
          %448 = sst [smem:[%s447]] 16
          %s449 = scalar_lea.smem [#allocation13], 3
          %450 = sst [smem:[%s449]] 128
          %s451 = scalar_lea.smem [#allocation13], 4
          %452 = sst [smem:[%s451]] 64
          %s453 = scalar_lea.smem [#allocation13], 5
          %454 = sst [smem:[%s453]] 4
          %456 = dma.general %s436, 8192, %s438, %s412, [#allocation12], [#allocation13], %s434, 0
        $region56: #{tpu_custom_call.1} parent=43 // pred_fallthru
          _
      $region44: #{tpu_custom_call.1} parent=5 // pred_fallthru
        _
      %p457 = scmp.le.s32.totalorder 1, %s30
      %p458 = scmp.lt.s32.totalorder %s30, 9
      %p459 = pnand %p457, %p458
      %p460 = pneg %p459
      // Predicated region
      $region57: #{tpu_custom_call.1} parent=5 // pred_check
        _
      $region58: #{tpu_custom_call.1} parent=5 // pred_check_branch
        %462 = sbr.rel (%p459) target = $region60
      $region59: #{tpu_custom_call.1} parent=5 // pred_region
        %s463 = ssub.s32 %s30, 1
        %s464 = sand.u32 %s92, 1
        %s465 = scalar_lea.sflag [#allocation5], %s464
        %s466 = sand.u32 %s92, 1
        %s467 = smul.addr %s466, 8
        %s468 = scalar_lea.vmem [#allocation4], %s467
        // Predicated region
        $region61: #{tpu_custom_call.1} parent=59 // pred_check
          %p469 = pneg %p105
        $region62: #{tpu_custom_call.1} parent=59 // pred_check_branch
          %471 = sbr.rel (%p469) target = $region64
        $region63: #{tpu_custom_call.1} parent=59 // pred_region
          %473 = dma.done %s465, 128
        $region64: #{tpu_custom_call.1} parent=59 // pred_fallthru
          _
        %s474 = sand.u32 %s120, 1
        %s475 = scalar_lea.sflag [#allocation8], %s474
        %s476 = sand.u32 %s120, 1
        %s477 = smul.addr %s476, 512
        %s478 = scalar_lea.vmem [#allocation7], %s477
        // Predicated region
        $region65: #{tpu_custom_call.1} parent=59 // pred_check
          %p479 = pneg %p133
        $region66: #{tpu_custom_call.1} parent=59 // pred_check_branch
          %481 = sbr.rel (%p479) target = $region68
        $region67: #{tpu_custom_call.1} parent=59 // pred_region
          %483 = dma.done %s475, 8192
        $region68: #{tpu_custom_call.1} parent=59 // pred_fallthru
          _
        %p484 = scmp.lt.s32.totalorder %s40, 1
        %s485 = scalar_select %p484, %s40, 1
        %p486 = scmp.lt.s32.totalorder %s42, 1
        %s487 = scalar_select %p486, %s42, 1
        %s488 = smul.addr %s485, 2
        %s489 = sadd.s32 %s487, %s488
        %s490 = smul.addr %s489, 8
        %s491 = scalar_lea.vmem %s0, %s490
        %p492 = pneg %p77
        %p493 = pneg %p74
        %s494 = sand.u32 %s92, 1
        %s495 = scalar_lea.sflag [#allocation5], %s494
        %s496 = sand.u32 %s92, 1
        %s497 = smul.addr %s496, 8
        %s498 = scalar_lea.vmem [#allocation4], %s497
        %p499 = pneg %p105
        %p500 = pneg %p102
        %s501 = sand.u32 %s120, 1
        %s502 = scalar_lea.sflag [#allocation8], %s501
        %s503 = sand.u32 %s120, 1
        %s504 = smul.addr %s503, 512
        %s505 = scalar_lea.vmem [#allocation7], %s504
        %p506 = pneg %p133
        %p507 = pneg %p130
        %p508 = pneg %p154
        %p509 = pneg %p151
        %p510 = pneg %p175
        %p511 = pneg %p172
        %p512 = pneg %p196
        %p513 = pneg %p193
        %p514 = pneg %p217
        %p515 = pneg %p214
        %p516 = pneg %p238
        %p517 = pneg %p235
        %p518 = pneg %p259
        %p519 = pneg %p256
        %p520 = pneg %p280
        %p521 = pneg %p277
        %p522 = pneg %p308
        %p523 = pneg %p305
        %s524 = sand.u32 %s295, 1
        %s525 = scalar_lea.sflag [#allocation6], %s524
        %s526 = sand.u32 %s295, 1
        %s527 = smul.addr %s526, 8
        %s528 = scalar_lea.vmem [#allocation9], %s527
        %p529 = pneg %p336
        %p530 = pneg %p333
        %s531 = sand.u32 %s323, 1
        %s532 = scalar_lea.sflag [#allocation11], %s531
        %s533 = sand.u32 %s323, 1
        %s534 = smul.addr %s533, 8
        %s535 = scalar_lea.vmem [#allocation10], %s534
        %p536 = scmp.lt.s32.totalorder %s40, 1
        %s537 = scalar_select %p536, %s40, 1
        %p538 = scmp.lt.s32.totalorder %s42, 1
        %s539 = scalar_select %p538, %s42, 1
        %s540 = smul.addr %s537, 2
        %s541 = sadd.s32 %s539, %s540
        %s542 = smul.addr %s541, 8
        %s543 = scalar_lea.vmem %s0, %s542
        %s544 = smul.u32 16, %s42
        %p545 = scmp.eq.s32.totalorder %s42, 0
        // Predicated region
        $region69: #{tpu_custom_call.1} parent=59 // pred_check
          %p546 = pneg %p545
        $region70: #{tpu_custom_call.1} parent=59 // pred_check_branch
          %548 = sbr.rel (%p546) target = $region72
        $region71: #{tpu_custom_call.1} parent=59 // pred_region
          %549 = vst [vmem:[#allocation3] sm:$0xff] 0.0
        $region72: #{tpu_custom_call.1} parent=59 // pred_fallthru
          _
        %v550 = vld [vmem:[%s543] sm:$0xff]
        %v551 = vld [vmem:[%s4] sm:$0xff]
        %v552 = vld [vmem:[%s5] sm:$0xff]
        %v553 = vrot.slane %v550, 4
        %v554 = vadd.f32 %v550, %v553
        %v555 = vrot.slane %v554, 2
        %v556 = vadd.f32 %v554, %v555
        %v557 = vrot.slane %v556, 1
        %v558 = vadd.f32 %v556, %v557
        %v559 = vrcp.pop 8.0
        %v560 = vmul.f32 8.0, %v559
        %v561 = vsub.f32 1.0, %v560
        %v562 = vmul.f32 %v559, %v561
        %v563 = vadd.f32 %v559, %v562
        %vm564 = vweird.f32 %v559
        %v565 = vsel %vm564, %v559, %v563
        %v566 = vmul.f32 %v558, %v565
        %v567 = vmul.f32 %v550, %v550
        %v568 = vrot.slane %v567, 4
        %v569 = vadd.f32 %v567, %v568
        %v570 = vrot.slane %v569, 2
        %v571 = vadd.f32 %v569, %v570
        %v572 = vrot.slane %v571, 1
        %v573 = vadd.f32 %v571, %v572
        %v574 = vmul.f32 %v573, %v565
        %v575 = vmul.f32 %v566, %v566
        %v576 = vsub.f32 %v574, %v575
        %v577 = vsub.f32 %v550, %v566
        %v578 = vadd.f32 %v576, 1e-05
        %v579 = vrsqrt.pop %v578
        %v580 = vmul.f32 %v579, %v578
        %v581 = vmul.f32 %v580, %v579
        %v582 = vmul.f32 0.5, %v581
        %v583 = vsub.f32 1.5, %v582
        %v584 = vmul.f32 %v579, %v583
        %vm585 = vweird.f32 %v578
        %vm586 = vweird.f32 %v579
        %vm587 = vmor %vm585, %vm586
        %v588 = vsel %vm587, %v579, %v584
        %v589 = vmul.f32 %v577, %v588
        %591 = vset.pattern.permute.xlu0 0
        %592 = vperm.xlu0 %591, %v551
        %v593 = vpop.permute.xlu0 %592
        %v595 = vmul.f32 %v589, %v593
        %597 = vset.pattern.permute.xlu0 0
        %598 = vperm.xlu0 %597, %v552
        %v599 = vpop.permute.xlu0 %598
        %v601 = vadd.f32 %v595, %v599
        %v602 = vpack.c.bf16 %v601, %v601
        %603 = vst [vmem:[#allocation2] sm:$0xf] %v602
        %v604 = vld [vmem:[#allocation2] sm:$0x1]
        %v605 = vld [vmem:[%s478] sm:$0xf]
        %v606 = vld [vmem:[%s478 + $0x4] sm:$0xf]
        %v607 = vld [vmem:[%s478 + $0x8] sm:$0xf]
        %v608 = vld [vmem:[%s478 + $0xc] sm:$0xf]
        %v609 = vld [vmem:[%s478 + $0x10] sm:$0xf]
        %v610 = vld [vmem:[%s478 + $0x14] sm:$0xf]
        %v611 = vld [vmem:[%s478 + $0x18] sm:$0xf]
        %v612 = vld [vmem:[%s478 + $0x1c] sm:$0xf]
        %v613 = vld [vmem:[%s478 + $0x20] sm:$0xf]
        %v614 = vld [vmem:[%s478 + $0x24] sm:$0xf]
        %v615 = vld [vmem:[%s478 + $0x28] sm:$0xf]
        %v616 = vld [vmem:[%s478 + $0x2c] sm:$0xf]
        %v617 = vld [vmem:[%s478 + $0x30] sm:$0xf]
        %v618 = vld [vmem:[%s478 + $0x34] sm:$0xf]
        %v619 = vld [vmem:[%s478 + $0x38] sm:$0xf]
        %v620 = vld [vmem:[%s478 + $0x3c] sm:$0xf]
        %v637 = vunpack.c.l.b16 %v605
        %v638 = vunpack.c.l.b16 %v606
        %v639 = vunpack.c.l.b16 %v607
        %v640 = vunpack.c.l.b16 %v608
        %v641 = vunpack.c.l.b16 %v609
        %v642 = vunpack.c.l.b16 %v610
        %v643 = vunpack.c.l.b16 %v611
        %v644 = vunpack.c.l.b16 %v612
        %v645 = vunpack.c.l.b16 %v613
        %v646 = vunpack.c.l.b16 %v614
        %v647 = vunpack.c.l.b16 %v615
        %v648 = vunpack.c.l.b16 %v616
        %v649 = vunpack.c.l.b16 %v617
        %v650 = vunpack.c.l.b16 %v618
        %v651 = vunpack.c.l.b16 %v619
        %v652 = vunpack.c.l.b16 %v620
        %v653 = vpack.c.b16 %v638, %v637
        %v654 = vpack.c.b16 %v640, %v639
        %v655 = vpack.c.b16 %v642, %v641
        %v656 = vpack.c.b16 %v644, %v643
        %v657 = vpack.c.b16 %v646, %v645
        %v658 = vpack.c.b16 %v648, %v647
        %v659 = vpack.c.b16 %v650, %v649
        %v660 = vpack.c.b16 %v652, %v651
        %669 = vmatpush.bf16.msra.mxu0 %v660
        %670 = vmatpush.bf16.msra.mxu0 %v659
        %671 = vmatpush.bf16.msra.mxu0 %v658
        %672 = vmatpush.bf16.msra.mxu0 %v657
        %673 = vmatpush.bf16.msra.mxu0 %v656
        %674 = vmatpush.bf16.msra.mxu0 %v655
        %675 = vmatpush.bf16.msra.mxu0 %v654
        %676 = vmatpush.bf16.msra.mxu0 %v653
        %677 = vmatmul.bf16.gmra.mxu0 %v604
        %v678 = vpop.f32.mrf.mxu0
        %v679 = vadd.f32 0.0, %v678
        %v680 = vpop.f32.mrf.mxu0
        %681 = vdwg.mxu0
        %v682 = vld [vmem:[#allocation3] sm:$0x1]
        %v683 = vadd.f32 %v682, %v679
        %684 = vst [vmem:[#allocation3] sm:$0x1] %v683
        %v685 = vld [vmem:[#allocation2] sm:$0x1]
        %s686 = scalar_lea.vmem %s478, 64 [#allocation7]
        %v687 = vld [vmem:[%s686] sm:$0xf]
        %v688 = vld [vmem:[%s686 + $0x4] sm:$0xf]
        %v689 = vld [vmem:[%s686 + $0x8] sm:$0xf]
        %v690 = vld [vmem:[%s686 + $0xc] sm:$0xf]
        %v691 = vld [vmem:[%s686 + $0x10] sm:$0xf]
        %v692 = vld [vmem:[%s686 + $0x14] sm:$0xf]
        %v693 = vld [vmem:[%s686 + $0x18] sm:$0xf]
        %v694 = vld [vmem:[%s686 + $0x1c] sm:$0xf]
        %v695 = vld [vmem:[%s686 + $0x20] sm:$0xf]
        %v696 = vld [vmem:[%s686 + $0x24] sm:$0xf]
        %v697 = vld [vmem:[%s686 + $0x28] sm:$0xf]
        %v698 = vld [vmem:[%s686 + $0x2c] sm:$0xf]
        %v699 = vld [vmem:[%s686 + $0x30] sm:$0xf]
        %v700 = vld [vmem:[%s686 + $0x34] sm:$0xf]
        %v701 = vld [vmem:[%s686 + $0x38] sm:$0xf]
        %v702 = vld [vmem:[%s686 + $0x3c] sm:$0xf]
        %v704 = vunpack.c.l.b16 %v685
        %v705 = vpack.c.b16 %v704, %v704
        %v707 = vshrl.u32 %v705, 16
        %v726 = vunpack.c.l.b16 %v687
        %v727 = vunpack.c.l.b16 %v688
        %v728 = vunpack.c.l.b16 %v689
        %v729 = vunpack.c.l.b16 %v690
        %v730 = vunpack.c.l.b16 %v691
        %v731 = vunpack.c.l.b16 %v692
        %v732 = vunpack.c.l.b16 %v693
        %v733 = vunpack.c.l.b16 %v694
        %v734 = vunpack.c.l.b16 %v695
        %v735 = vunpack.c.l.b16 %v696
        %v736 = vunpack.c.l.b16 %v697
        %v737 = vunpack.c.l.b16 %v698
        %v738 = vunpack.c.l.b16 %v699
        %v739 = vunpack.c.l.b16 %v700
        %v740 = vunpack.c.l.b16 %v701
        %v741 = vunpack.c.l.b16 %v702
        %v742 = vpack.c.b16 %v727, %v726
        %v743 = vpack.c.b16 %v729, %v728
        %v744 = vpack.c.b16 %v731, %v730
        %v745 = vpack.c.b16 %v733, %v732
        %v746 = vpack.c.b16 %v735, %v734
        %v747 = vpack.c.b16 %v737, %v736
        %v748 = vpack.c.b16 %v739, %v738
        %v749 = vpack.c.b16 %v741, %v740
        %758 = vmatpush.bf16.msra.mxu0 %v749
        %759 = vmatpush.bf16.msra.mxu0 %v748
        %760 = vmatpush.bf16.msra.mxu0 %v747
        %761 = vmatpush.bf16.msra.mxu0 %v746
        %762 = vmatpush.bf16.msra.mxu0 %v745
        %763 = vmatpush.bf16.msra.mxu0 %v744
        %764 = vmatpush.bf16.msra.mxu0 %v743
        %765 = vmatpush.bf16.msra.mxu0 %v742
        %766 = vmatmul.bf16.gmra.mxu0 %v707
        %v767 = vpop.f32.mrf.mxu0
        %v768 = vadd.f32 0.0, %v767
        %v769 = vpop.f32.mrf.mxu0
        %770 = vdwg.mxu0
        %v771 = vld [vmem:[#allocation3 + $0x1] sm:$0x1]
        %v772 = vadd.f32 %v771, %v768
        %773 = vst [vmem:[#allocation3 + $0x1] sm:$0x1] %v772
        %v774 = vld [vmem:[#allocation2] sm:$0x2]
        %s775 = scalar_lea.vmem %s478, 128 [#allocation7]
        %v776 = vld [vmem:[%s775] sm:$0xf]
        %v777 = vld [vmem:[%s775 + $0x4] sm:$0xf]
        %v778 = vld [vmem:[%s775 + $0x8] sm:$0xf]
        %v779 = vld [vmem:[%s775 + $0xc] sm:$0xf]
        %v780 = vld [vmem:[%s775 + $0x10] sm:$0xf]
        %v781 = vld [vmem:[%s775 + $0x14] sm:$0xf]
        %v782 = vld [vmem:[%s775 + $0x18] sm:$0xf]
        %v783 = vld [vmem:[%s775 + $0x1c] sm:$0xf]
        %v784 = vld [vmem:[%s775 + $0x20] sm:$0xf]
        %v785 = vld [vmem:[%s775 + $0x24] sm:$0xf]
        %v786 = vld [vmem:[%s775 + $0x28] sm:$0xf]
        %v787 = vld [vmem:[%s775 + $0x2c] sm:$0xf]
        %v788 = vld [vmem:[%s775 + $0x30] sm:$0xf]
        %v789 = vld [vmem:[%s775 + $0x34] sm:$0xf]
        %v790 = vld [vmem:[%s775 + $0x38] sm:$0xf]
        %v791 = vld [vmem:[%s775 + $0x3c] sm:$0xf]
        %v793 = vunpack.c.l.b16 %v774
        %v794 = vpack.c.b16 %v793, %v793
        %v795 = vrot.slane %v794, 1
        %v813 = vunpack.c.l.b16 %v776
        %v814 = vunpack.c.l.b16 %v777
        %v815 = vunpack.c.l.b16 %v778
        %v816 = vunpack.c.l.b16 %v779
        %v817 = vunpack.c.l.b16 %v780
        %v818 = vunpack.c.l.b16 %v781
        %v819 = vunpack.c.l.b16 %v782
        %v820 = vunpack.c.l.b16 %v783
        %v821 = vunpack.c.l.b16 %v784
        %v822 = vunpack.c.l.b16 %v785
        %v823 = vunpack.c.l.b16 %v786
        %v824 = vunpack.c.l.b16 %v787
        %v825 = vunpack.c.l.b16 %v788
        %v826 = vunpack.c.l.b16 %v789
        %v827 = vunpack.c.l.b16 %v790
        %v828 = vunpack.c.l.b16 %v791
        %v829 = vpack.c.b16 %v814, %v813
        %v830 = vpack.c.b16 %v816, %v815
        %v831 = vpack.c.b16 %v818, %v817
        %v832 = vpack.c.b16 %v820, %v819
        %v833 = vpack.c.b16 %v822, %v821
        %v834 = vpack.c.b16 %v824, %v823
        %v835 = vpack.c.b16 %v826, %v825
        %v836 = vpack.c.b16 %v828, %v827
        %845 = vmatpush.bf16.msra.mxu0 %v836
        %846 = vmatpush.bf16.msra.mxu0 %v835
        %847 = vmatpush.bf16.msra.mxu0 %v834
        %848 = vmatpush.bf16.msra.mxu0 %v833
        %849 = vmatpush.bf16.msra.mxu0 %v832
        %850 = vmatpush.bf16.msra.mxu0 %v831
        %851 = vmatpush.bf16.msra.mxu0 %v830
        %852 = vmatpush.bf16.msra.mxu0 %v829
        %853 = vmatmul.bf16.gmra.mxu0 %v795
        %v854 = vpop.f32.mrf.mxu0
        %v855 = vadd.f32 0.0, %v854
        %v856 = vpop.f32.mrf.mxu0
        %857 = vdwg.mxu0
        %v858 = vld [vmem:[#allocation3 + $0x2] sm:$0x1]
        %v859 = vadd.f32 %v858, %v855
        %860 = vst [vmem:[#allocation3 + $0x2] sm:$0x1] %v859
        %v861 = vld [vmem:[#allocation2] sm:$0x2]
        %s862 = scalar_lea.vmem %s478, 192 [#allocation7]
        %v863 = vld [vmem:[%s862] sm:$0xf]
        %v864 = vld [vmem:[%s862 + $0x4] sm:$0xf]
        %v865 = vld [vmem:[%s862 + $0x8] sm:$0xf]
        %v866 = vld [vmem:[%s862 + $0xc] sm:$0xf]
        %v867 = vld [vmem:[%s862 + $0x10] sm:$0xf]
        %v868 = vld [vmem:[%s862 + $0x14] sm:$0xf]
        %v869 = vld [vmem:[%s862 + $0x18] sm:$0xf]
        %v870 = vld [vmem:[%s862 + $0x1c] sm:$0xf]
        %v871 = vld [vmem:[%s862 + $0x20] sm:$0xf]
        %v872 = vld [vmem:[%s862 + $0x24] sm:$0xf]
        %v873 = vld [vmem:[%s862 + $0x28] sm:$0xf]
        %v874 = vld [vmem:[%s862 + $0x2c] sm:$0xf]
        %v875 = vld [vmem:[%s862 + $0x30] sm:$0xf]
        %v876 = vld [vmem:[%s862 + $0x34] sm:$0xf]
        %v877 = vld [vmem:[%s862 + $0x38] sm:$0xf]
        %v878 = vld [vmem:[%s862 + $0x3c] sm:$0xf]
        %v880 = vunpack.c.l.b16 %v861
        %v881 = vpack.c.b16 %v880, %v880
        %v883 = vshrl.u32 %v881, 16
        %v885 = vrot.slane %v883, 1
        %v903 = vunpack.c.l.b16 %v863
        %v904 = vunpack.c.l.b16 %v864
        %v905 = vunpack.c.l.b16 %v865
        %v906 = vunpack.c.l.b16 %v866
        %v907 = vunpack.c.l.b16 %v867
        %v908 = vunpack.c.l.b16 %v868
        %v909 = vunpack.c.l.b16 %v869
        %v910 = vunpack.c.l.b16 %v870
        %v911 = vunpack.c.l.b16 %v871
        %v912 = vunpack.c.l.b16 %v872
        %v913 = vunpack.c.l.b16 %v873
        %v914 = vunpack.c.l.b16 %v874
        %v915 = vunpack.c.l.b16 %v875
        %v916 = vunpack.c.l.b16 %v876
        %v917 = vunpack.c.l.b16 %v877
        %v918 = vunpack.c.l.b16 %v878
        %v919 = vpack.c.b16 %v904, %v903
        %v920 = vpack.c.b16 %v906, %v905
        %v921 = vpack.c.b16 %v908, %v907
        %v922 = vpack.c.b16 %v910, %v909
        %v923 = vpack.c.b16 %v912, %v911
        %v924 = vpack.c.b16 %v914, %v913
        %v925 = vpack.c.b16 %v916, %v915
        %v926 = vpack.c.b16 %v918, %v917
        %935 = vmatpush.bf16.msra.mxu0 %v926
        %936 = vmatpush.bf16.msra.mxu0 %v925
        %937 = vmatpush.bf16.msra.mxu0 %v924
        %938 = vmatpush.bf16.msra.mxu0 %v923
        %939 = vmatpush.bf16.msra.mxu0 %v922
        %940 = vmatpush.bf16.msra.mxu0 %v921
        %941 = vmatpush.bf16.msra.mxu0 %v920
        %942 = vmatpush.bf16.msra.mxu0 %v919
        %943 = vmatmul.bf16.gmra.mxu0 %v885
        %v944 = vpop.f32.mrf.mxu0
        %v945 = vadd.f32 0.0, %v944
        %v946 = vpop.f32.mrf.mxu0
        %947 = vdwg.mxu0
        %v948 = vld [vmem:[#allocation3 + $0x3] sm:$0x1]
        %v949 = vadd.f32 %v948, %v945
        %950 = vst [vmem:[#allocation3 + $0x3] sm:$0x1] %v949
        %v951 = vld [vmem:[#allocation2] sm:$0x4]
        %s952 = scalar_lea.vmem %s478, 256 [#allocation7]
        %v953 = vld [vmem:[%s952] sm:$0xf]
        %v954 = vld [vmem:[%s952 + $0x4] sm:$0xf]
        %v955 = vld [vmem:[%s952 + $0x8] sm:$0xf]
        %v956 = vld [vmem:[%s952 + $0xc] sm:$0xf]
        %v957 = vld [vmem:[%s952 + $0x10] sm:$0xf]
        %v958 = vld [vmem:[%s952 + $0x14] sm:$0xf]
        %v959 = vld [vmem:[%s952 + $0x18] sm:$0xf]
        %v960 = vld [vmem:[%s952 + $0x1c] sm:$0xf]
        %v961 = vld [vmem:[%s952 + $0x20] sm:$0xf]
        %v962 = vld [vmem:[%s952 + $0x24] sm:$0xf]
        %v963 = vld [vmem:[%s952 + $0x28] sm:$0xf]
        %v964 = vld [vmem:[%s952 + $0x2c] sm:$0xf]
        %v965 = vld [vmem:[%s952 + $0x30] sm:$0xf]
        %v966 = vld [vmem:[%s952 + $0x34] sm:$0xf]
        %v967 = vld [vmem:[%s952 + $0x38] sm:$0xf]
        %v968 = vld [vmem:[%s952 + $0x3c] sm:$0xf]
        %v970 = vunpack.c.l.b16 %v951
        %v971 = vpack.c.b16 %v970, %v970
        %v972 = vrot.slane %v971, 2
        %v990 = vunpack.c.l.b16 %v953
        %v991 = vunpack.c.l.b16 %v954
        %v992 = vunpack.c.l.b16 %v955
        %v993 = vunpack.c.l.b16 %v956
        %v994 = vunpack.c.l.b16 %v957
        %v995 = vunpack.c.l.b16 %v958
        %v996 = vunpack.c.l.b16 %v959
        %v997 = vunpack.c.l.b16 %v960
        %v998 = vunpack.c.l.b16 %v961
        %v999 = vunpack.c.l.b16 %v962
        %v1000 = vunpack.c.l.b16 %v963
        %v1001 = vunpack.c.l.b16 %v964
        %v1002 = vunpack.c.l.b16 %v965
        %v1003 = vunpack.c.l.b16 %v966
        %v1004 = vunpack.c.l.b16 %v967
        %v1005 = vunpack.c.l.b16 %v968
        %v1006 = vpack.c.b16 %v991, %v990
        %v1007 = vpack.c.b16 %v993, %v992
        %v1008 = vpack.c.b16 %v995, %v994
        %v1009 = vpack.c.b16 %v997, %v996
        %v1010 = vpack.c.b16 %v999, %v998
        %v1011 = vpack.c.b16 %v1001, %v1000
        %v1012 = vpack.c.b16 %v1003, %v1002
        %v1013 = vpack.c.b16 %v1005, %v1004
        %1022 = vmatpush.bf16.msra.mxu0 %v1013
        %1023 = vmatpush.bf16.msra.mxu0 %v1012
        %1024 = vmatpush.bf16.msra.mxu0 %v1011
        %1025 = vmatpush.bf16.msra.mxu0 %v1010
        %1026 = vmatpush.bf16.msra.mxu0 %v1009
        %1027 = vmatpush.bf16.msra.mxu0 %v1008
        %1028 = vmatpush.bf16.msra.mxu0 %v1007
        %1029 = vmatpush.bf16.msra.mxu0 %v1006
        %1030 = vmatmul.bf16.gmra.mxu0 %v972
        %v1031 = vpop.f32.mrf.mxu0
        %v1032 = vadd.f32 0.0, %v1031
        %v1033 = vpop.f32.mrf.mxu0
        %1034 = vdwg.mxu0
        %v1035 = vld [vmem:[#allocation3 + $0x4] sm:$0x1]
        %v1036 = vadd.f32 %v1035, %v1032
        %1037 = vst [vmem:[#allocation3 + $0x4] sm:$0x1] %v1036
        %v1038 = vld [vmem:[#allocation2] sm:$0x4]
        %s1039 = scalar_lea.vmem %s478, 320 [#allocation7]
        %v1040 = vld [vmem:[%s1039] sm:$0xf]
        %v1041 = vld [vmem:[%s1039 + $0x4] sm:$0xf]
        %v1042 = vld [vmem:[%s1039 + $0x8] sm:$0xf]
        %v1043 = vld [vmem:[%s1039 + $0xc] sm:$0xf]
        %v1044 = vld [vmem:[%s1039 + $0x10] sm:$0xf]
        %v1045 = vld [vmem:[%s1039 + $0x14] sm:$0xf]
        %v1046 = vld [vmem:[%s1039 + $0x18] sm:$0xf]
        %v1047 = vld [vmem:[%s1039 + $0x1c] sm:$0xf]
        %v1048 = vld [vmem:[%s1039 + $0x20] sm:$0xf]
        %v1049 = vld [vmem:[%s1039 + $0x24] sm:$0xf]
        %v1050 = vld [vmem:[%s1039 + $0x28] sm:$0xf]
        %v1051 = vld [vmem:[%s1039 + $0x2c] sm:$0xf]
        %v1052 = vld [vmem:[%s1039 + $0x30] sm:$0xf]
        %v1053 = vld [vmem:[%s1039 + $0x34] sm:$0xf]
        %v1054 = vld [vmem:[%s1039 + $0x38] sm:$0xf]
        %v1055 = vld [vmem:[%s1039 + $0x3c] sm:$0xf]
        %v1057 = vunpack.c.l.b16 %v1038
        %v1058 = vpack.c.b16 %v1057, %v1057
        %v1060 = vshrl.u32 %v1058, 16
        %v1062 = vrot.slane %v1060, 2
        %v1080 = vunpack.c.l.b16 %v1040
        %v1081 = vunpack.c.l.b16 %v1041
        %v1082 = vunpack.c.l.b16 %v1042
        %v1083 = vunpack.c.l.b16 %v1043
        %v1084 = vunpack.c.l.b16 %v1044
        %v1085 = vunpack.c.l.b16 %v1045
        %v1086 = vunpack.c.l.b16 %v1046
        %v1087 = vunpack.c.l.b16 %v1047
        %v1088 = vunpack.c.l.b16 %v1048
        %v1089 = vunpack.c.l.b16 %v1049
        %v1090 = vunpack.c.l.b16 %v1050
        %v1091 = vunpack.c.l.b16 %v1051
        %v1092 = vunpack.c.l.b16 %v1052
        %v1093 = vunpack.c.l.b16 %v1053
        %v1094 = vunpack.c.l.b16 %v1054
        %v1095 = vunpack.c.l.b16 %v1055
        %v1096 = vpack.c.b16 %v1081, %v1080
        %v1097 = vpack.c.b16 %v1083, %v1082
        %v1098 = vpack.c.b16 %v1085, %v1084
        %v1099 = vpack.c.b16 %v1087, %v1086
        %v1100 = vpack.c.b16 %v1089, %v1088
        %v1101 = vpack.c.b16 %v1091, %v1090
        %v1102 = vpack.c.b16 %v1093, %v1092
        %v1103 = vpack.c.b16 %v1095, %v1094
        %1112 = vmatpush.bf16.msra.mxu0 %v1103
        %1113 = vmatpush.bf16.msra.mxu0 %v1102
        %1114 = vmatpush.bf16.msra.mxu0 %v1101
        %1115 = vmatpush.bf16.msra.mxu0 %v1100
        %1116 = vmatpush.bf16.msra.mxu0 %v1099
        %1117 = vmatpush.bf16.msra.mxu0 %v1098
        %1118 = vmatpush.bf16.msra.mxu0 %v1097
        %1119 = vmatpush.bf16.msra.mxu0 %v1096
        %1120 = vmatmul.bf16.gmra.mxu0 %v1062
        %v1121 = vpop.f32.mrf.mxu0
        %v1122 = vadd.f32 0.0, %v1121
        %v1123 = vpop.f32.mrf.mxu0
        %1124 = vdwg.mxu0
        %v1125 = vld [vmem:[#allocation3 + $0x5] sm:$0x1]
        %v1126 = vadd.f32 %v1125, %v1122
        %1127 = vst [vmem:[#allocation3 + $0x5] sm:$0x1] %v1126
        %v1128 = vld [vmem:[#allocation2] sm:$0x8]
        %s1129 = scalar_lea.vmem %s478, 384 [#allocation7]
        %v1130 = vld [vmem:[%s1129] sm:$0xf]
        %v1131 = vld [vmem:[%s1129 + $0x4] sm:$0xf]
        %v1132 = vld [vmem:[%s1129 + $0x8] sm:$0xf]
        %v1133 = vld [vmem:[%s1129 + $0xc] sm:$0xf]
        %v1134 = vld [vmem:[%s1129 + $0x10] sm:$0xf]
        %v1135 = vld [vmem:[%s1129 + $0x14] sm:$0xf]
        %v1136 = vld [vmem:[%s1129 + $0x18] sm:$0xf]
        %v1137 = vld [vmem:[%s1129 + $0x1c] sm:$0xf]
        %v1138 = vld [vmem:[%s1129 + $0x20] sm:$0xf]
        %v1139 = vld [vmem:[%s1129 + $0x24] sm:$0xf]
        %v1140 = vld [vmem:[%s1129 + $0x28] sm:$0xf]
        %v1141 = vld [vmem:[%s1129 + $0x2c] sm:$0xf]
        %v1142 = vld [vmem:[%s1129 + $0x30] sm:$0xf]
        %v1143 = vld [vmem:[%s1129 + $0x34] sm:$0xf]
        %v1144 = vld [vmem:[%s1129 + $0x38] sm:$0xf]
        %v1145 = vld [vmem:[%s1129 + $0x3c] sm:$0xf]
        %v1147 = vunpack.c.l.b16 %v1128
        %v1148 = vpack.c.b16 %v1147, %v1147
        %v1149 = vrot.slane %v1148, 3
        %v1167 = vunpack.c.l.b16 %v1130
        %v1168 = vunpack.c.l.b16 %v1131
        %v1169 = vunpack.c.l.b16 %v1132
        %v1170 = vunpack.c.l.b16 %v1133
        %v1171 = vunpack.c.l.b16 %v1134
        %v1172 = vunpack.c.l.b16 %v1135
        %v1173 = vunpack.c.l.b16 %v1136
        %v1174 = vunpack.c.l.b16 %v1137
        %v1175 = vunpack.c.l.b16 %v1138
        %v1176 = vunpack.c.l.b16 %v1139
        %v1177 = vunpack.c.l.b16 %v1140
        %v1178 = vunpack.c.l.b16 %v1141
        %v1179 = vunpack.c.l.b16 %v1142
        %v1180 = vunpack.c.l.b16 %v1143
        %v1181 = vunpack.c.l.b16 %v1144
        %v1182 = vunpack.c.l.b16 %v1145
        %v1183 = vpack.c.b16 %v1168, %v1167
        %v1184 = vpack.c.b16 %v1170, %v1169
        %v1185 = vpack.c.b16 %v1172, %v1171
        %v1186 = vpack.c.b16 %v1174, %v1173
        %v1187 = vpack.c.b16 %v1176, %v1175
        %v1188 = vpack.c.b16 %v1178, %v1177
        %v1189 = vpack.c.b16 %v1180, %v1179
        %v1190 = vpack.c.b16 %v1182, %v1181
        %1199 = vmatpush.bf16.msra.mxu0 %v1190
        %1200 = vmatpush.bf16.msra.mxu0 %v1189
        %1201 = vmatpush.bf16.msra.mxu0 %v1188
        %1202 = vmatpush.bf16.msra.mxu0 %v1187
        %1203 = vmatpush.bf16.msra.mxu0 %v1186
        %1204 = vmatpush.bf16.msra.mxu0 %v1185
        %1205 = vmatpush.bf16.msra.mxu0 %v1184
        %1206 = vmatpush.bf16.msra.mxu0 %v1183
        %1207 = vmatmul.bf16.gmra.mxu0 %v1149
        %v1208 = vpop.f32.mrf.mxu0
        %v1209 = vadd.f32 0.0, %v1208
        %v1210 = vpop.f32.mrf.mxu0
        %1211 = vdwg.mxu0
        %v1212 = vld [vmem:[#allocation3 + $0x6] sm:$0x1]
        %v1213 = vadd.f32 %v1212, %v1209
        %1214 = vst [vmem:[#allocation3 + $0x6] sm:$0x1] %v1213
        %v1215 = vld [vmem:[#allocation2] sm:$0x8]
        %s1216 = scalar_lea.vmem %s478, 448 [#allocation7]
        %v1217 = vld [vmem:[%s1216] sm:$0xf]
        %v1218 = vld [vmem:[%s1216 + $0x4] sm:$0xf]
        %v1219 = vld [vmem:[%s1216 + $0x8] sm:$0xf]
        %v1220 = vld [vmem:[%s1216 + $0xc] sm:$0xf]
        %v1221 = vld [vmem:[%s1216 + $0x10] sm:$0xf]
        %v1222 = vld [vmem:[%s1216 + $0x14] sm:$0xf]
        %v1223 = vld [vmem:[%s1216 + $0x18] sm:$0xf]
        %v1224 = vld [vmem:[%s1216 + $0x1c] sm:$0xf]
        %v1225 = vld [vmem:[%s1216 + $0x20] sm:$0xf]
        %v1226 = vld [vmem:[%s1216 + $0x24] sm:$0xf]
        %v1227 = vld [vmem:[%s1216 + $0x28] sm:$0xf]
        %v1228 = vld [vmem:[%s1216 + $0x2c] sm:$0xf]
        %v1229 = vld [vmem:[%s1216 + $0x30] sm:$0xf]
        %v1230 = vld [vmem:[%s1216 + $0x34] sm:$0xf]
        %v1231 = vld [vmem:[%s1216 + $0x38] sm:$0xf]
        %v1232 = vld [vmem:[%s1216 + $0x3c] sm:$0xf]
        %v1234 = vunpack.c.l.b16 %v1215
        %v1235 = vpack.c.b16 %v1234, %v1234
        %v1237 = vshrl.u32 %v1235, 16
        %v1239 = vrot.slane %v1237, 3
        %v1257 = vunpack.c.l.b16 %v1217
        %v1258 = vunpack.c.l.b16 %v1218
        %v1259 = vunpack.c.l.b16 %v1219
        %v1260 = vunpack.c.l.b16 %v1220
        %v1261 = vunpack.c.l.b16 %v1221
        %v1262 = vunpack.c.l.b16 %v1222
        %v1263 = vunpack.c.l.b16 %v1223
        %v1264 = vunpack.c.l.b16 %v1224
        %v1265 = vunpack.c.l.b16 %v1225
        %v1266 = vunpack.c.l.b16 %v1226
        %v1267 = vunpack.c.l.b16 %v1227
        %v1268 = vunpack.c.l.b16 %v1228
        %v1269 = vunpack.c.l.b16 %v1229
        %v1270 = vunpack.c.l.b16 %v1230
        %v1271 = vunpack.c.l.b16 %v1231
        %v1272 = vunpack.c.l.b16 %v1232
        %v1273 = vpack.c.b16 %v1258, %v1257
        %v1274 = vpack.c.b16 %v1260, %v1259
        %v1275 = vpack.c.b16 %v1262, %v1261
        %v1276 = vpack.c.b16 %v1264, %v1263
        %v1277 = vpack.c.b16 %v1266, %v1265
        %v1278 = vpack.c.b16 %v1268, %v1267
        %v1279 = vpack.c.b16 %v1270, %v1269
        %v1280 = vpack.c.b16 %v1272, %v1271
        %1289 = vmatpush.bf16.msra.mxu0 %v1280
        %1290 = vmatpush.bf16.msra.mxu0 %v1279
        %1291 = vmatpush.bf16.msra.mxu0 %v1278
        %1292 = vmatpush.bf16.msra.mxu0 %v1277
        %1293 = vmatpush.bf16.msra.mxu0 %v1276
        %1294 = vmatpush.bf16.msra.mxu0 %v1275
        %1295 = vmatpush.bf16.msra.mxu0 %v1274
        %1296 = vmatpush.bf16.msra.mxu0 %v1273
        %1297 = vmatmul.bf16.gmra.mxu0 %v1239
        %v1298 = vpop.f32.mrf.mxu0
        %v1299 = vadd.f32 0.0, %v1298
        %v1300 = vpop.f32.mrf.mxu0
        %1301 = vdwg.mxu0
        %v1302 = vld [vmem:[#allocation3 + $0x7] sm:$0x1]
        %v1303 = vadd.f32 %v1302, %v1299
        %1304 = vst [vmem:[#allocation3 + $0x7] sm:$0x1] %v1303
        %p1305 = scmp.eq.s32.totalorder %s42, 1
        // Predicated region
        $region73: #{tpu_custom_call.1} parent=59 // pred_check
          %p1306 = pneg %p1305
        $region74: #{tpu_custom_call.1} parent=59 // pred_check_branch
          %1308 = sbr.rel (%p1306) target = $region76
        $region75: #{tpu_custom_call.1} parent=59 // pred_region
          %v1309 = vld [vmem:[%s468] sm:$0xff]
          %v1310 = vld [vmem:[%s4] sm:$0xff]
          %v1311 = vld [vmem:[%s5] sm:$0xff]
          %v1312 = vrot.slane %v1309, 4
          %v1313 = vadd.f32 %v1309, %v1312
          %v1314 = vrot.slane %v1313, 2
          %v1315 = vadd.f32 %v1313, %v1314
          %v1316 = vrot.slane %v1315, 1
          %v1317 = vadd.f32 %v1315, %v1316
          %v1318 = vmul.f32 %v1317, %v565
          %v1319 = vmul.f32 %v1309, %v1309
          %v1320 = vrot.slane %v1319, 4
          %v1321 = vadd.f32 %v1319, %v1320
          %v1322 = vrot.slane %v1321, 2
          %v1323 = vadd.f32 %v1321, %v1322
          %v1324 = vrot.slane %v1323, 1
          %v1325 = vadd.f32 %v1323, %v1324
          %v1326 = vmul.f32 %v1325, %v565
          %v1327 = vmul.f32 %v1318, %v1318
          %v1328 = vsub.f32 %v1326, %v1327
          %v1329 = vsub.f32 %v1309, %v1318
          %v1330 = vadd.f32 %v1328, 1e-05
          %v1331 = vrsqrt.pop %v1330
          %v1332 = vmul.f32 %v1331, %v1330
          %v1333 = vmul.f32 %v1332, %v1331
          %v1334 = vmul.f32 0.5, %v1333
          %v1335 = vsub.f32 1.5, %v1334
          %v1336 = vmul.f32 %v1331, %v1335
          %vm1337 = vweird.f32 %v1330
          %vm1338 = vweird.f32 %v1331
          %vm1339 = vmor %vm1337, %vm1338
          %v1340 = vsel %vm1339, %v1331, %v1336
          %v1341 = vmul.f32 %v1329, %v1340
          %1343 = vset.pattern.permute.xlu0 0
          %1344 = vperm.xlu0 %1343, %v1310
          %v1345 = vpop.permute.xlu0 %1344
          %v1347 = vmul.f32 %v1341, %v1345
          %1349 = vset.pattern.permute.xlu0 0
          %1350 = vperm.xlu0 %1349, %v1311
          %v1351 = vpop.permute.xlu0 %1350
          %v1353 = vadd.f32 %v1347, %v1351
          %v1354 = vld [vmem:[#allocation3] sm:$0xff]
          %v1355 = vld [vmem:[%s3] sm:$0xff]
          %1357 = vset.pattern.permute.xlu0 0
          %1358 = vperm.xlu0 %1357, %v1355
          %v1359 = vpop.permute.xlu0 %1358
          %v1361 = vmul.f32 %v1359, %v1353
          %v1362 = vadd.f32 %v1354, %v1361
          %v1363 = vmul.f32 %v1362, %v1362
          %v1364 = vmul.f32 %v1362, %v1363
          %v1365 = vmul.f32 %v1364, 0.044715
          %v1366 = vadd.f32 %v1362, %v1365
          %v1367 = vmul.f32 %v1366, 0.7978846
          %v1368 = vtanh.pop %v1367
          %v1369 = vadd.f32 %v1368, 1.0
          %v1370 = vmul.f32 %v1369, 0.5
          %v1371 = vmul.f32 %v1362, %v1370
          %v1372 = vld [vmem:[%s6] sm:$0xff]
          %v1373 = vld [vmem:[%s7] sm:$0xff]
          %1375 = vset.pattern.permute.xlu0 0
          %1376 = vperm.xlu0 %1375, %v1373
          %v1377 = vpop.permute.xlu0 %1376
          %vm1379 = vcmask 64512
          %v1381 = vsel %vm1379, %v1372, 0
          %1383 = vmatpush.msra.mxu0 0.0
          %1384 = vmatpush.msra.mxu0 0.0
          %1385 = vmatpush.msra.mxu0 0.0
          %1386 = vmatpush.msra.mxu0 0.0
          %1387 = vmatpush.msra.mxu0 0.0
          %1388 = vmatpush.msra.mxu0 0.0
          %1389 = vmatpush.msra.mxu0 0.0
          %1390 = vmatpush.msra.mxu0 0.0
          %1391 = vmatpush.msra.mxu0 0.0
          %1392 = vmatpush.msra.mxu0 0.0
          %1393 = vmatpush.msra.mxu0 0.0
          %1394 = vmatpush.msra.mxu0 0.0
          %1395 = vmatpush.msra.mxu0 0.0
          %1396 = vmatpush.msra.mxu0 0.0
          %1397 = vmatpush.msra.mxu0 0.0
          %1398 = vmatpush.msra.mxu0 %v1371
          %1399 = vmatmul.f32.gmra.mxu0 %v1381
          %v1400 = vpop.f32.mrf.mxu0
          %v1401 = vadd.f32 %v1377, %v1400
          %1402 = vdwg.mxu0
          %v1403 = vadd.f32 %v1401, %v1309
          %v1404 = vtanh.pop %v1403
          %v1405 = vxor.u32 %v1403, 2147483648
          %v1406 = vmul.f32 %v1405, 1.442695
          %v1407 = vpow.pop %v1406
          %v1408 = vadd.f32 %v1407, 1.0
          %v1409 = vrcp.pop %v1408
          %v1410 = vmul.f32 %v1408, %v1409
          %v1411 = vsub.f32 1.0, %v1410
          %v1412 = vmul.f32 %v1409, %v1411
          %v1413 = vadd.f32 %v1409, %v1412
          %vm1414 = vweird.f32 %v1408
          %vm1415 = vweird.f32 %v1409
          %vm1416 = vmor %vm1414, %vm1415
          %v1417 = vsel %vm1416, %v1409, %v1413
          %v1418 = vand.u32 2147483647, %v1408
          %vm1419 = vcmp.eq.f32.partialorder %v1418, 8.507059e+37
          %v1420 = vand.u32 %v1408, 2147483648
          %v1421 = vor.u32 1.1754944e-38, %v1420
          %v1422 = vsel %vm1419, %v1421, %v1417
          %v1423 = vmul.f32 1.0, %v1422
          %v1424 = vmul.f32 %v1404, %v1423
          %v1425 = vld [vmem:[%s8] sm:$0xff]
          %v1426 = vld [vmem:[%s8 + $0x8] sm:$0xff]
          %v1427 = vld [vmem:[%s9] sm:$0xff]
          %v1428 = vld [vmem:[%s9 + $0x8] sm:$0xff]
          %1430 = vset.pattern.permute.xlu0 0
          %1431 = vperm.xlu0 %1430, %v1427
          %v1432 = vpop.permute.xlu0 %1431
          %1435 = vset.pattern.permute.xlu0 0
          %1436 = vperm.xlu0 %1435, %v1428
          %v1437 = vpop.permute.xlu0 %1436
          %v1440 = vsel %vm1379, %v1425, 0
          %v1443 = vsel %vm1379, %v1426, 0
          %1445 = vmatpush.msra.mxu0 0.0
          %1446 = vmatpush.msra.mxu0 0.0
          %1447 = vmatpush.msra.mxu0 0.0
          %1448 = vmatpush.msra.mxu0 0.0
          %1449 = vmatpush.msra.mxu0 0.0
          %1450 = vmatpush.msra.mxu0 0.0
          %1451 = vmatpush.msra.mxu0 0.0
          %1452 = vmatpush.msra.mxu0 0.0
          %1453 = vmatpush.msra.mxu0 0.0
          %1454 = vmatpush.msra.mxu0 0.0
          %1455 = vmatpush.msra.mxu0 0.0
          %1456 = vmatpush.msra.mxu0 0.0
          %1457 = vmatpush.msra.mxu0 0.0
          %1458 = vmatpush.msra.mxu0 0.0
          %1459 = vmatpush.msra.mxu0 0.0
          %1460 = vmatpush.msra.mxu0 %v1424
          %1461 = vmatmul.f32.gmra.mxu0 %v1440
          %v1462 = vpop.f32.mrf.mxu0
          %v1463 = vadd.f32 %v1432, %v1462
          %1464 = vmatmul.f32.gmra.mxu0 %v1443
          %v1465 = vpop.f32.mrf.mxu0
          %v1466 = vadd.f32 %v1437, %v1465
          %1467 = vdwg.mxu0
          %v1468 = vadd.f32 %v1463, %v1309
          %1469 = vst [vmem:[%s528] sm:$0xff] %v1468
          %1470 = vst [vmem:[%s535] sm:$0xff] %v1466
        $region76: #{tpu_custom_call.1} parent=59 // pred_fallthru
          _
        %s1471 = sand.u32 %s295, 1
        %s1472 = scalar_lea.sflag [#allocation6], %s1471
        %s1473 = sand.u32 %s295, 1
        %s1474 = smul.addr %s1473, 8
        %s1475 = scalar_lea.vmem [#allocation9], %s1474
        %s1476 = sand.u32 %s323, 1
        %s1477 = scalar_lea.sflag [#allocation11], %s1476
        %s1478 = sand.u32 %s323, 1
        %s1479 = smul.addr %s1478, 8
        %s1480 = scalar_lea.vmem [#allocation10], %s1479
        // Predicated region
        $region77: #{tpu_custom_call.1} parent=59 // pred_check
          %p1481 = pneg %p305
        $region78: #{tpu_custom_call.1} parent=59 // pred_check_branch
          %1483 = sbr.rel (%p1481) target = $region80
        $region79: #{tpu_custom_call.1} parent=59 // pred_region
          %1485 = vsyncadd %s1472, 0
          %s1486 = smul.addr %s40, 2
          %s1487 = sadd.s32 %s41, %s1486
          %s1488 = smul.addr %s1487, 8
          %s1489 = scalar_lea.hbm %s10, %s1488
          %s1491 = sshll.u32 %s1475, 4
          %s1492 = int_to_ptr.vmem [resolvable:$true] %s1491
          %s1493 = sshll.u32 %s1489, 4
          %s1494 = int_to_ptr.hbm [resolvable:$true] %s1493
          %1496 = dma.vmem_to_hbm [thread:$0]  %s1492, 128, %s1494, %s1472
        $region80: #{tpu_custom_call.1} parent=59 // pred_fallthru
          _
        // Predicated region
        $region81: #{tpu_custom_call.1} parent=59 // pred_check
          %p1497 = pneg %p333
        $region82: #{tpu_custom_call.1} parent=59 // pred_check_branch
          %1499 = sbr.rel (%p1497) target = $region84
        $region83: #{tpu_custom_call.1} parent=59 // pred_region
          %1501 = vsyncadd %s1477, 0
          %s1502 = smul.addr %s40, 2
          %s1503 = sadd.s32 %s41, %s1502
          %s1504 = smul.addr %s1503, 8
          %s1505 = scalar_lea.hbm %s11, %s1504
          %s1507 = sshll.u32 %s1480, 4
          %s1508 = int_to_ptr.vmem [resolvable:$true] %s1507
          %s1509 = sshll.u32 %s1505, 4
          %s1510 = int_to_ptr.hbm [resolvable:$true] %s1509
          %1512 = dma.vmem_to_hbm [thread:$0]  %s1508, 128, %s1510, %s1477
        $region84: #{tpu_custom_call.1} parent=59 // pred_fallthru
          _
      $region60: #{tpu_custom_call.1} parent=5 // pred_fallthru
        _
      %p1513 = scmp.le.s32.totalorder 2, %s30
      // Predicated region
      $region85: #{tpu_custom_call.1} parent=5 // pred_check
        %p1514 = pneg %p1513
      $region86: #{tpu_custom_call.1} parent=5 // pred_check_branch
        %1516 = sbr.rel (%p1514) target = $region88
      $region87: #{tpu_custom_call.1} parent=5 // pred_region
        %s1517 = ssub.s32 %s30, 2
        // Predicated region
        $region89: #{tpu_custom_call.1} parent=87 // pred_check
          %p1518 = pneg %p311
        $region90: #{tpu_custom_call.1} parent=87 // pred_check_branch
          %1520 = sbr.rel (%p1518) target = $region92
        $region91: #{tpu_custom_call.1} parent=87 // pred_region
          %s1521 = sand.u32 %s296, 1
          %s1522 = scalar_lea.sflag [#allocation6], %s1521
          %s1523 = sand.u32 %s296, 1
          %s1524 = smul.addr %s1523, 8
          %s1525 = scalar_lea.vmem [#allocation9], %s1524
          %1527 = dma.done %s1522, 128
        $region92: #{tpu_custom_call.1} parent=87 // pred_fallthru
          _
        // Predicated region
        $region93: #{tpu_custom_call.1} parent=87 // pred_check
          %p1528 = pneg %p339
        $region94: #{tpu_custom_call.1} parent=87 // pred_check_branch
          %1530 = sbr.rel (%p1528) target = $region96
        $region95: #{tpu_custom_call.1} parent=87 // pred_region
          %s1531 = sand.u32 %s324, 1
          %s1532 = scalar_lea.sflag [#allocation11], %s1531
          %s1533 = sand.u32 %s324, 1
          %s1534 = smul.addr %s1533, 8
          %s1535 = scalar_lea.vmem [#allocation10], %s1534
          %1537 = dma.done %s1532, 128
        $region96: #{tpu_custom_call.1} parent=87 // pred_fallthru
          _
      $region88: #{tpu_custom_call.1} parent=5 // pred_fallthru
        _
    $region6: #{tpu_custom_call.1} parent=1 // loop_footer
      %s34 = sadd.s32 1, %s30
    $region7: #{tpu_custom_call.1} parent=1 // loop_footer_branch
      %29 = sbr.rel target = $region3
    $region8: #{tpu_custom_call.1} parent=1 // loop_exit
      _
    %1538 = vsyncpa [#allocation5], 1
    %s1539 = scalar_lea.sflag [#allocation5], 1
    %1540 = vsyncpa %s1539, 1
    %1541 = vsyncpa [#allocation8], 1
    %s1542 = scalar_lea.sflag [#allocation8], 1
    %1543 = vsyncpa %s1542, 1
    %1544 = vsyncpa [#allocation6], 1
    %s1545 = scalar_lea.sflag [#allocation6], 1
    %1546 = vsyncpa %s1545, 1
    %1547 = vsyncpa [#allocation11], 1
    %s1548 = scalar_lea.sflag [#allocation11], 1
    %1549 = vsyncpa %s1548, 1

</llo_original>
